<compile_context>
chip_gen: v7x
topology: tpu7x:2x2x1
jax: 0.10.0
libtpu: 0.0.40
codegen_flags: <defaults>
</compile_context>

<pallas_src>
import jax
import jax.numpy as jnp
from jax.experimental import pallas as pl
from jax.experimental.pallas import tpu as pltpu


LANE = 128

# Original (PyTorch) structure: 8 Linear layers.
LAYER_DIMS = [784, 128, 64, 12, 3, 12, 64, 128, 784]
ACTIVATIONS = ("relu", "relu", "relu", None, "relu", "relu", "relu", "tanh")

# Fused structure used by the kernel (12->3 and 3->12 folded into 12->12):
# 7 layers, ReLU after the first 6, Tanh after the last.
FUSED_DIMS = [784, 128, 64, 12, 12, 64, 128, 784]
N_INNER = 5   # five padded 128x128 inner layers


# ----------------------------------------------------------------------------
# Kernel
# ----------------------------------------------------------------------------
def autoencoder_kernel(x_ref, w_first_ref, w_inner_ref, w_last_ref,
                       b_inner_ref, b_last_ref, out_ref):
    # Layer 1: 784 -> 128, ReLU.  bf16 x bf16 on the MXU, f32 accumulation.
    h = jnp.dot(x_ref[...].astype(jnp.bfloat16), w_first_ref[...],
                preferred_element_type=jnp.float32)
    h = jnp.maximum(h + b_inner_ref[0:1, :], 0.0)

    # Inner fused layers 2..6: padded 128x128 matmuls + ReLU, all lane-dense.
    for li in range(N_INNER):
        h = jnp.dot(h.astype(jnp.bfloat16), w_inner_ref[li],
                    preferred_element_type=jnp.float32)
        h = jnp.maximum(h + b_inner_ref[li + 1:li + 2, :], 0.0)

    # Last layer: 128 -> 784, Tanh.
    h = jnp.dot(h.astype(jnp.bfloat16), w_last_ref[...],
                preferred_element_type=jnp.float32)
    out_ref[...] = jnp.tanh(h + b_last_ref[...]).astype(out_ref.dtype)


# ----------------------------------------------------------------------------
# Parameters
# ----------------------------------------------------------------------------
def make_params(key):
    """Original (unfused) params; weight[i]: (in, out) bf16, bias[i]: (1, out) f32."""
    params = []
    for i in range(len(LAYER_DIMS) - 1):
        d_in, d_out = LAYER_DIMS[i], LAYER_DIMS[i + 1]
        key, kw, kb = jax.random.split(key, 3)
        bound = 1.0 / (d_in ** 0.5)                       # mimic nn.Linear init range
        w = jax.random.uniform(kw, (d_in, d_out), jnp.float32, -bound, bound)
        b = jax.random.uniform(kb, (1, d_out), jnp.float32, -bound, bound)
        params += [w.astype(jnp.bfloat16), b]
    return params


def prep_params(params):
    """Host-side prep: fuse the activation-free 12->3->12 pair, zero-pad
    intermediate feature dims to 128 lanes, and pack into 5 slabs."""
    ws = [params[2 * i].astype(jnp.float32) for i in range(8)]
    bs = [params[2 * i + 1].astype(jnp.float32) for i in range(8)]

    # Fuse layer 4 (12->3, no activation) with layer 5 (3->12):
    #   (x@W4 + b4)@W5 + b5 == x@(W4@W5) + (b4@W5 + b5)
    w45 = ws[3] @ ws[4]
    b45 = bs[3] @ ws[4] + bs[4]
    ws = ws[:3] + [w45] + ws[5:]      # 7 weights
    bs = bs[:3] + [b45] + bs[5:]      # 7 biases

    def pad_w(w, d_in_p, d_out_p):
        return (jnp.zeros((d_in_p, d_out_p), jnp.float32)
                .at[: w.shape[0], : w.shape[1]].set(w))

    def pad_b(b, d_out_p):
        return jnp.zeros((d_out_p,), jnp.float32).at[: b.shape[1]].set(b[0])

    w_first = pad_w(ws[0], 784, LANE).astype(jnp.bfloat16)                 # (784,128)
    w_inner = jnp.stack([pad_w(ws[i], LANE, LANE)
                         for i in range(1, 6)]).astype(jnp.bfloat16)       # (5,128,128)
    w_last = pad_w(ws[6], LANE, 784).astype(jnp.bfloat16)                  # (128,784)
    b_inner = jnp.stack([pad_b(bs[i], LANE) for i in range(6)])            # (6,128) f32
    b_last = bs[6].reshape(1, 784)                                         # (1,784) f32
    return w_first, w_inner, w_last, b_inner, b_last


# ----------------------------------------------------------------------------
# Wrapper
# ----------------------------------------------------------------------------
def _pick_batch_tile(B, requested=None, max_tile=1024, min_grid=4):
    """Largest sublane-aligned power-of-two divisor of B, capped at B//min_grid
    (keep >= 4 grid steps for pipelining and both v7x TensorCores) and at
    max_tile.  VMEM stays well under every generation's default scoped limit:
    tb=512 ~ 7.3 MiB double-buffered, tb=1024 ~ 13.5 MiB (< 16 MiB v5e default,
    < 32 MiB v6e/v7x default scoped, 64 MiB v7x physical)."""
    if requested is not None:
        assert B % requested == 0, "batch must be divisible by batch_tile"
        return requested
    cap = min(max_tile, max(B // min_grid, 8))
    for cand in (1024, 512, 256, 128, 64, 32, 16, 8):
        if cand <= cap and B % cand == 0:
            return cand
    return B  # tiny / odd batches: single full-extent block


def autoencoder_forward(x, params, *, batch_tile=None, vmem_limit_bytes=None):
    B, D = x.shape
    assert D == LAYER_DIMS[0]

    w_first, w_inner, w_last, b_inner, b_last = prep_params(params)
    tb = _pick_batch_tile(B, batch_tile)
    grid = (B // tb,)

    in_specs = [
        pl.BlockSpec((tb, D), lambda i: (i, 0)),            # x tile
        pl.BlockSpec(w_first.shape, lambda i: (0, 0)),      # (784,128)  bf16
        pl.BlockSpec(w_inner.shape, lambda i: (0, 0, 0)),   # (5,128,128) bf16
        pl.BlockSpec(w_last.shape, lambda i: (0, 0)),       # (128,784)  bf16
        pl.BlockSpec(b_inner.shape, lambda i: (0, 0)),      # (6,128)    f32
        pl.BlockSpec(b_last.shape, lambda i: (0, 0)),       # (1,784)    f32
    ]
    out_spec = pl.BlockSpec((tb, D), lambda i: (i, 0))

    flops = 2 * B * sum(FUSED_DIMS[i] * FUSED_DIMS[i + 1]
                        for i in range(len(FUSED_DIMS) - 1))
    weight_bytes = sum(int(p.size) * p.dtype.itemsize
                       for p in (w_first, w_inner, w_last, b_inner, b_last))
    cost = pl.CostEstimate(
        flops=flops,
        transcendentals=B * D,                   # final tanh
        bytes_accessed=2 * B * D * 4 + weight_bytes,
    )

    return pl.pallas_call(
        autoencoder_kernel,
        out_shape=jax.ShapeDtypeStruct((B, D), jnp.float32),
        grid_spec=pltpu.PrefetchScalarGridSpec(
            num_scalar_prefetch=0,
            grid=grid,
            in_specs=in_specs,
            out_specs=out_spec,
        ),
        compiler_params=pltpu.CompilerParams(
            dimension_semantics=("parallel",),   # batch tiles are independent
            vmem_limit_bytes=vmem_limit_bytes,   # only needed for huge tiles
        ),
        cost_estimate=cost,
    )(x, w_first, w_inner, w_last, b_inner, b_last)


# ----------------------------------------------------------------------------
# Pure-JAX reference (f32 math, same bf16 weights, original unfused layers)
# ----------------------------------------------------------------------------
def reference_forward(x, params):
    h = x
    n_layers = len(params) // 2
    for li in range(n_layers):
        w = params[2 * li].astype(jnp.float32)
        b = params[2 * li + 1].astype(jnp.float32)
        h = h @ w + b
        act = ACTIVATIONS[li]
        if act == "relu":
            h = jnp.maximum(h, 0.0)
        elif act == "tanh":
            h = jnp.tanh(h)
    return h


if __name__ == "__main__":
    key = jax.random.PRNGKey(0)
    key, kx = jax.random.split(key)

    B = 64                                       # auto-picked tile 16 -> grid of 4
    x = jax.random.normal(kx, (B, 28 * 28), jnp.float32)
    params = make_params(key)

    out = jax.block_until_ready(autoencoder_forward(x, params))
    ref = reference_forward(x, params)

    assert out.shape == (B, 28 * 28)
    # Kernel rounds activations to bf16 before each matmul (and fuses the
    # 12->3->12 pair) -> ~1e-2-level diffs vs the f32 reference.
    assert jnp.allclose(out, ref, atol=5e-2, rtol=5e-2), (
        f"mismatch vs reference (max abs err {jnp.max(jnp.abs(out - ref)):.4e})")

    print("KERNEL_OK")
</pallas_src>

<mosaic_0001>
module attributes {stable_mosaic.version = 11 : i64} {
  func.func @autoencoder_kernel(%arg0: i32, %arg1: memref<16x784xf32, #tpu.memory_space<vmem>>, %arg2: memref<784x128xbf16, #tpu.memory_space<vmem>>, %arg3: memref<5x128x128xbf16, #tpu.memory_space<vmem>>, %arg4: memref<128x784xbf16, #tpu.memory_space<vmem>>, %arg5: memref<6x128xf32, #tpu.memory_space<vmem>>, %arg6: memref<1x784xf32, #tpu.memory_space<vmem>>, %arg7: memref<16x784xf32, #tpu.memory_space<vmem>>) attributes {dimension_semantics = [#tpu.dimension_semantics<parallel>], iteration_bounds = array<i64: 4>, scalar_prefetch = 0 : i64, scratch_operands = 0 : i64, tpu.core_type = #tpu.core_type<tc>, window_params = [{transform_indices = @transform_0, window_bounds = array<i64: 16, 784>}, {pipeline_mode = #tpu.pipeline_mode<synchronous>, transform_indices = @transform_1, window_bounds = array<i64: 784, 128>}, {pipeline_mode = #tpu.pipeline_mode<synchronous>, transform_indices = @transform_2, window_bounds = array<i64: 5, 128, 128>}, {pipeline_mode = #tpu.pipeline_mode<synchronous>, transform_indices = @transform_3, window_bounds = array<i64: 128, 784>}, {pipeline_mode = #tpu.pipeline_mode<synchronous>, transform_indices = @transform_4, window_bounds = array<i64: 6, 128>}, {pipeline_mode = #tpu.pipeline_mode<synchronous>, transform_indices = @transform_5, window_bounds = array<i64: 1, 784>}, {transform_indices = @transform_6, window_bounds = array<i64: 16, 784>}]} {
    %c0 = arith.constant 0 : index
    %c0_0 = arith.constant 0 : index
    %0 = vector.load %arg1[%c0, %c0_0] : memref<16x784xf32, #tpu.memory_space<vmem>>, vector<16x784xf32>
    %1 = arith.truncf %0 : vector<16x784xf32> to vector<16x784xbf16>
    %c0_1 = arith.constant 0 : index
    %c0_2 = arith.constant 0 : index
    %2 = vector.load %arg2[%c0_1, %c0_2] : memref<784x128xbf16, #tpu.memory_space<vmem>>, vector<784x128xbf16>
    %cst = arith.constant dense<0.000000e+00> : vector<16x128xf32>
    %3 = tpu.matmul %1, %2, %cst {dimension_numbers = #tpu.dot_dimension_numbers<[1], [0], [0], [1], [0, 0, 1, 1], [], []>} : vector<16x784xbf16>, vector<784x128xbf16>, vector<16x128xf32> -> vector<16x128xf32>
    %c0_3 = arith.constant 0 : index
    %c0_4 = arith.constant 0 : index
    %4 = vector.load %arg5[%c0_3, %c0_4] : memref<6x128xf32, #tpu.memory_space<vmem>>, vector<1x128xf32>
    %5 = vector.broadcast %4 : vector<1x128xf32> to vector<16x128xf32>
    %6 = arith.addf %3, %5 : vector<16x128xf32>
    %cst_5 = arith.constant 0.000000e+00 : f32
    %7 = vector.broadcast %cst_5 : f32 to vector<16x128xf32>
    %8 = arith.maximumf %6, %7 : vector<16x128xf32>
    %9 = arith.truncf %8 : vector<16x128xf32> to vector<16x128xbf16>
    %c0_6 = arith.constant 0 : index
    %c0_7 = arith.constant 0 : index
    %c0_8 = arith.constant 0 : index
    %10 = vector.load %arg3[%c0_6, %c0_7, %c0_8] : memref<5x128x128xbf16, #tpu.memory_space<vmem>>, vector<1x128x128xbf16>
    %11 = vector.shape_cast %10 : vector<1x128x128xbf16> to vector<128x128xbf16>
    %cst_9 = arith.constant dense<0.000000e+00> : vector<16x128xf32>
    %12 = tpu.matmul %9, %11, %cst_9 {dimension_numbers = #tpu.dot_dimension_numbers<[1], [0], [0], [1], [0, 0, 1, 1], [], []>} : vector<16x128xbf16>, vector<128x128xbf16>, vector<16x128xf32> -> vector<16x128xf32>
    %c1 = arith.constant 1 : index
    %c0_10 = arith.constant 0 : index
    %13 = vector.load %arg5[%c1, %c0_10] : memref<6x128xf32, #tpu.memory_space<vmem>>, vector<1x128xf32>
    %14 = vector.broadcast %13 : vector<1x128xf32> to vector<16x128xf32>
    %15 = arith.addf %12, %14 : vector<16x128xf32>
    %cst_11 = arith.constant 0.000000e+00 : f32
    %16 = vector.broadcast %cst_11 : f32 to vector<16x128xf32>
    %17 = arith.maximumf %15, %16 : vector<16x128xf32>
    %18 = arith.truncf %17 : vector<16x128xf32> to vector<16x128xbf16>
    %c1_12 = arith.constant 1 : index
    %c0_13 = arith.constant 0 : index
    %c0_14 = arith.constant 0 : index
    %19 = vector.load %arg3[%c1_12, %c0_13, %c0_14] : memref<5x128x128xbf16, #tpu.memory_space<vmem>>, vector<1x128x128xbf16>
    %20 = vector.shape_cast %19 : vector<1x128x128xbf16> to vector<128x128xbf16>
    %cst_15 = arith.constant dense<0.000000e+00> : vector<16x128xf32>
    %21 = tpu.matmul %18, %20, %cst_15 {dimension_numbers = #tpu.dot_dimension_numbers<[1], [0], [0], [1], [0, 0, 1, 1], [], []>} : vector<16x128xbf16>, vector<128x128xbf16>, vector<16x128xf32> -> vector<16x128xf32>
    %c2 = arith.constant 2 : index
    %c0_16 = arith.constant 0 : index
    %22 = vector.load %arg5[%c2, %c0_16] : memref<6x128xf32, #tpu.memory_space<vmem>>, vector<1x128xf32>
    %23 = vector.broadcast %22 : vector<1x128xf32> to vector<16x128xf32>
    %24 = arith.addf %21, %23 : vector<16x128xf32>
    %cst_17 = arith.constant 0.000000e+00 : f32
    %25 = vector.broadcast %cst_17 : f32 to vector<16x128xf32>
    %26 = arith.maximumf %24, %25 : vector<16x128xf32>
    %27 = arith.truncf %26 : vector<16x128xf32> to vector<16x128xbf16>
    %c2_18 = arith.constant 2 : index
    %c0_19 = arith.constant 0 : index
    %c0_20 = arith.constant 0 : index
    %28 = vector.load %arg3[%c2_18, %c0_19, %c0_20] : memref<5x128x128xbf16, #tpu.memory_space<vmem>>, vector<1x128x128xbf16>
    %29 = vector.shape_cast %28 : vector<1x128x128xbf16> to vector<128x128xbf16>
    %cst_21 = arith.constant dense<0.000000e+00> : vector<16x128xf32>
    %30 = tpu.matmul %27, %29, %cst_21 {dimension_numbers = #tpu.dot_dimension_numbers<[1], [0], [0], [1], [0, 0, 1, 1], [], []>} : vector<16x128xbf16>, vector<128x128xbf16>, vector<16x128xf32> -> vector<16x128xf32>
    %c3 = arith.constant 3 : index
    %c0_22 = arith.constant 0 : index
    %31 = vector.load %arg5[%c3, %c0_22] : memref<6x128xf32, #tpu.memory_space<vmem>>, vector<1x128xf32>
    %32 = vector.broadcast %31 : vector<1x128xf32> to vector<16x128xf32>
    %33 = arith.addf %30, %32 : vector<16x128xf32>
    %cst_23 = arith.constant 0.000000e+00 : f32
    %34 = vector.broadcast %cst_23 : f32 to vector<16x128xf32>
    %35 = arith.maximumf %33, %34 : vector<16x128xf32>
    %36 = arith.truncf %35 : vector<16x128xf32> to vector<16x128xbf16>
    %c3_24 = arith.constant 3 : index
    %c0_25 = arith.constant 0 : index
    %c0_26 = arith.constant 0 : index
    %37 = vector.load %arg3[%c3_24, %c0_25, %c0_26] : memref<5x128x128xbf16, #tpu.memory_space<vmem>>, vector<1x128x128xbf16>
    %38 = vector.shape_cast %37 : vector<1x128x128xbf16> to vector<128x128xbf16>
    %cst_27 = arith.constant dense<0.000000e+00> : vector<16x128xf32>
    %39 = tpu.matmul %36, %38, %cst_27 {dimension_numbers = #tpu.dot_dimension_numbers<[1], [0], [0], [1], [0, 0, 1, 1], [], []>} : vector<16x128xbf16>, vector<128x128xbf16>, vector<16x128xf32> -> vector<16x128xf32>
    %c4 = arith.constant 4 : index
    %c0_28 = arith.constant 0 : index
    %40 = vector.load %arg5[%c4, %c0_28] : memref<6x128xf32, #tpu.memory_space<vmem>>, vector<1x128xf32>
    %41 = vector.broadcast %40 : vector<1x128xf32> to vector<16x128xf32>
    %42 = arith.addf %39, %41 : vector<16x128xf32>
    %cst_29 = arith.constant 0.000000e+00 : f32
    %43 = vector.broadcast %cst_29 : f32 to vector<16x128xf32>
    %44 = arith.maximumf %42, %43 : vector<16x128xf32>
    %45 = arith.truncf %44 : vector<16x128xf32> to vector<16x128xbf16>
    %c4_30 = arith.constant 4 : index
    %c0_31 = arith.constant 0 : index
    %c0_32 = arith.constant 0 : index
    %46 = vector.load %arg3[%c4_30, %c0_31, %c0_32] : memref<5x128x128xbf16, #tpu.memory_space<vmem>>, vector<1x128x128xbf16>
    %47 = vector.shape_cast %46 : vector<1x128x128xbf16> to vector<128x128xbf16>
    %cst_33 = arith.constant dense<0.000000e+00> : vector<16x128xf32>
    %48 = tpu.matmul %45, %47, %cst_33 {dimension_numbers = #tpu.dot_dimension_numbers<[1], [0], [0], [1], [0, 0, 1, 1], [], []>} : vector<16x128xbf16>, vector<128x128xbf16>, vector<16x128xf32> -> vector<16x128xf32>
    %c5 = arith.constant 5 : index
    %c0_34 = arith.constant 0 : index
    %49 = vector.load %arg5[%c5, %c0_34] : memref<6x128xf32, #tpu.memory_space<vmem>>, vector<1x128xf32>
    %50 = vector.broadcast %49 : vector<1x128xf32> to vector<16x128xf32>
    %51 = arith.addf %48, %50 : vector<16x128xf32>
    %cst_35 = arith.constant 0.000000e+00 : f32
    %52 = vector.broadcast %cst_35 : f32 to vector<16x128xf32>
    %53 = arith.maximumf %51, %52 : vector<16x128xf32>
    %54 = arith.truncf %53 : vector<16x128xf32> to vector<16x128xbf16>
    %c0_36 = arith.constant 0 : index
    %c0_37 = arith.constant 0 : index
    %55 = vector.load %arg4[%c0_36, %c0_37] : memref<128x784xbf16, #tpu.memory_space<vmem>>, vector<128x784xbf16>
    %cst_38 = arith.constant dense<0.000000e+00> : vector<16x784xf32>
    %56 = tpu.matmul %54, %55, %cst_38 {dimension_numbers = #tpu.dot_dimension_numbers<[1], [0], [0], [1], [0, 0, 1, 1], [], []>} : vector<16x128xbf16>, vector<128x784xbf16>, vector<16x784xf32> -> vector<16x784xf32>
    %c0_39 = arith.constant 0 : index
    %c0_40 = arith.constant 0 : index
    %57 = vector.load %arg6[%c0_39, %c0_40] : memref<1x784xf32, #tpu.memory_space<vmem>>, vector<1x784xf32>
    %58 = vector.broadcast %57 : vector<1x784xf32> to vector<16x784xf32>
    %59 = arith.addf %56, %58 : vector<16x784xf32>
    %60 = math.tanh %59 : vector<16x784xf32>
    %c0_41 = arith.constant 0 : index
    %c0_42 = arith.constant 0 : index
    %61 = vector.load %arg7[%c0_41, %c0_42] : memref<16x784xf32, #tpu.memory_space<vmem>>, vector<16x784xf32>
    tpu.vector_store %arg7[%c0_41, %c0_42], %60 {strides = array<i32>} : memref<16x784xf32, #tpu.memory_space<vmem>>, vector<16x784xf32>,
    return
  }
  func.func @transform_0(%arg0: i32) -> (i32, i32) {
    %c0_i32 = arith.constant 0 : i32
    %c0_i32_0 = arith.constant 0 : i32
    return %arg0, %c0_i32 : i32, i32
  }
  func.func @transform_1(%arg0: i32) -> (i32, i32) {
    %c0_i32 = arith.constant 0 : i32
    %c0_i32_0 = arith.constant 0 : i32
    %c0_i32_1 = arith.constant 0 : i32
    return %c0_i32, %c0_i32_0 : i32, i32
  }
  func.func @transform_2(%arg0: i32) -> (i32, i32, i32) {
    %c0_i32 = arith.constant 0 : i32
    %c0_i32_0 = arith.constant 0 : i32
    %c0_i32_1 = arith.constant 0 : i32
    %c0_i32_2 = arith.constant 0 : i32
    return %c0_i32, %c0_i32_0, %c0_i32_1 : i32, i32, i32
  }
  func.func @transform_3(%arg0: i32) -> (i32, i32) {
    %c0_i32 = arith.constant 0 : i32
    %c0_i32_0 = arith.constant 0 : i32
    %c0_i32_1 = arith.constant 0 : i32
    return %c0_i32, %c0_i32_0 : i32, i32
  }
  func.func @transform_4(%arg0: i32) -> (i32, i32) {
    %c0_i32 = arith.constant 0 : i32
    %c0_i32_0 = arith.constant 0 : i32
    %c0_i32_1 = arith.constant 0 : i32
    return %c0_i32, %c0_i32_0 : i32, i32
  }
  func.func @transform_5(%arg0: i32) -> (i32, i32) {
    %c0_i32 = arith.constant 0 : i32
    %c0_i32_0 = arith.constant 0 : i32
    %c0_i32_1 = arith.constant 0 : i32
    return %c0_i32, %c0_i32_0 : i32, i32
  }
  func.func @transform_6(%arg0: i32) -> (i32, i32) {
    %c0_i32 = arith.constant 0 : i32
    %c0_i32_0 = arith.constant 0 : i32
    return %arg0, %c0_i32 : i32, i32
  }
}

</mosaic_0001>

<llo_original>
// kernel: tpu_custom_call.1
$region0: #{tpu_custom_call.1}
  #allocation0 [shape = 'u32[]', space=smem, size = 0x4, offset = 0x4, fixed_abs, tag = 'smem constant byte address 0x4 - core index']
  #allocation1 [shape = 'u32[144,128]{1,0:T(1,128)}', space=vmem, size = 0x12000, scoped, tag = 'internal scratch']
  %s0 = inlined_call_operand.vmem [shape: f32[64,784], index: 0, kind: input, shape index: {}]
  %s1 = inlined_call_operand.vmem [shape: bf16[784,128], index: 1, kind: input, shape index: {}]
  %s2 = inlined_call_operand.hbm [shape: bf16[5,128,128], index: 2, kind: input, shape index: {}]
  %s3 = inlined_call_operand.vmem [shape: bf16[128,784], index: 3, kind: input, shape index: {}]
  %s4 = inlined_call_operand.vmem [shape: f32[6,128], index: 4, kind: input, shape index: {}]
  %s5 = inlined_call_operand.hbm [shape: f32[1,784], index: 5, kind: input, shape index: {}]
  %s6 = inlined_call_operand.hbm [shape: f32[64,784], index: 6, kind: output, shape index: {}]
  %s7 = sld [smem:[#allocation0]]
  $region65: #{tpu_custom_call.1} parent=0
    _
  %s9 = ssub.s32 1, %s7
  %s10 = scalar_select 0, %s9, %s7
  $region1: #{tpu_custom_call.1} parent=0
    #allocation2 [shape = 'u8[163840]{0}', space=vmem, size = 0x28000, scoped, tag = 'input window, operand 2, single buffered']
    #allocation3 [shape = 's32[2]{0}', space=sflag, size = 0x8, scoped, tag = 'scoped memory for tpu_custom_call.1']
    #allocation4 [shape = 's32[2]{0}', space=sflag, size = 0x8, scoped, tag = 'scoped memory for tpu_custom_call.1']
    #allocation5 [shape = 'u8[3584]{0}', space=vmem, size = 0x1000, scoped, tag = 'input window, operand 5, single buffered']
    #allocation6 [shape = 's32[1]{0}', space=sflag, size = 0x4, scoped, tag = 'scoped memory for tpu_custom_call.1']
    #allocation7 [shape = 'u8[114688]{0}', space=vmem, size = 0x1c000, scoped, tag = 'output window, operand 0']
    %11 = vsyncpa [#allocation3], 0
    %12 = vsyncpa [#allocation6], 0
    %13 = vsyncpa [#allocation4], 0
    %s14 = scalar_lea.sflag [#allocation4], 1
    %15 = vsyncpa %s14, 0
    loop: start=0, step=1, limit=6
    $region2: #{tpu_custom_call.1} parent=1 // loop_pre_header
      _
    $region3: #{tpu_custom_call.1} parent=1 // loop_header
      %s17 = sphi 0, %s21
      %p18 = scmp.ge.s32.totalorder %s17, 6
      %s27 = sphi 0, %s29
      %s30 = sphi 0, %s27
      %s31 = sphi 0, %s30
      %s47 = sphi 0, %s31
      %s51 = sphi 0, %s51
      %s53 = sphi 0, %s51
      %s54 = sphi 0, %s53
      %s68 = sphi 0, %s54
      %s72 = sphi 0, %s72
      %s74 = sphi 0, %s72
      %s75 = sphi 0, %s74
      %s89 = sphi 0, %s75
      %s93 = sphi 0, %s93
      %s95 = sphi 0, %s93
      %s96 = sphi 0, %s95
      %s110 = sphi 0, %s96
      %s114 = sphi 0, %s114
      %s116 = sphi 0, %s114
      %s117 = sphi 0, %s116
      %s131 = sphi 0, %s117
      %s135 = sphi 0, %s135
      %s137 = sphi 0, %s135
      %s138 = sphi 0, %s137
      %s152 = sphi 0, %s138
      %s158 = sphi 0, %s160
      %s161 = sphi 0, %s158
      %s162 = sphi 0, %s161
      %s178 = sphi 0, %s162
    $region4: #{tpu_custom_call.1} parent=1 // loop_header_branch
      %20 = sbr.rel (%p18) target = $region8
    $region5: #{tpu_custom_call.1} parent=1 // loop_body
      %s22 = ssub.s32 %s17, 1
      %s23 = ssub.s32 %s17, 2
      %s24 = sadd.s32 %s17, 1
      %s25 = ssub.s32 %s17, %s24
      %p26 = scmp.eq.s32.totalorder %s25, 0
      %s28 = sadd.s32 %s27, 1
      %s29 = scalar_select %p26, %s27, %s28
      %p32 = pneg %p26
      %p33 = scmp.eq.s32.totalorder %s17, 3
      %p34 = por %p32, %p33
      %p35 = scmp.ne.s32.totalorder %s27, %s30
      %p36 = scmp.eq.s32.totalorder %s17, 0
      %p37 = por %p35, %p36
      %p38 = scmp.ne.s32.totalorder %s27, %s30
      %p39 = scmp.eq.s32.totalorder %s22, 3
      %p40 = por %p38, %p39
      %p41 = scmp.ne.s32.totalorder %s30, %s31
      %p42 = scmp.eq.s32.totalorder %s22, 0
      %p43 = por %p41, %p42
      %p44 = scmp.ne.s32.totalorder %s30, %s31
      %p45 = scmp.eq.s32.totalorder %s23, 3
      %p46 = por %p44, %p45
      %p48 = scmp.ne.s32.totalorder %s31, %s47
      %p49 = scmp.eq.s32.totalorder %s23, 0
      %p50 = por %p48, %p49
      %s52 = sadd.s32 %s51, 1
      %p55 = scmp.eq.s32.totalorder %s17, 3
      %p56 = scmp.ne.s32.totalorder %s51, %s53
      %p57 = scmp.eq.s32.totalorder %s17, 0
      %p58 = por %p56, %p57
      %p59 = scmp.ne.s32.totalorder %s51, %s53
      %p60 = scmp.eq.s32.totalorder %s22, 3
      %p61 = por %p59, %p60
      %p62 = scmp.ne.s32.totalorder %s53, %s54
      %p63 = scmp.eq.s32.totalorder %s22, 0
      %p64 = por %p62, %p63
      %p65 = scmp.ne.s32.totalorder %s53, %s54
      %p66 = scmp.eq.s32.totalorder %s23, 3
      %p67 = por %p65, %p66
      %p69 = scmp.ne.s32.totalorder %s54, %s68
      %p70 = scmp.eq.s32.totalorder %s23, 0
      %p71 = por %p69, %p70
      %s73 = sadd.s32 %s72, 1
      %p76 = scmp.eq.s32.totalorder %s17, 3
      %p77 = scmp.ne.s32.totalorder %s72, %s74
      %p78 = scmp.eq.s32.totalorder %s17, 0
      %p79 = por %p77, %p78
      %p80 = scmp.ne.s32.totalorder %s72, %s74
      %p81 = scmp.eq.s32.totalorder %s22, 3
      %p82 = por %p80, %p81
      %p83 = scmp.ne.s32.totalorder %s74, %s75
      %p84 = scmp.eq.s32.totalorder %s22, 0
      %p85 = por %p83, %p84
      %p86 = scmp.ne.s32.totalorder %s74, %s75
      %p87 = scmp.eq.s32.totalorder %s23, 3
      %p88 = por %p86, %p87
      %p90 = scmp.ne.s32.totalorder %s75, %s89
      %p91 = scmp.eq.s32.totalorder %s23, 0
      %p92 = por %p90, %p91
      %s94 = sadd.s32 %s93, 1
      %p97 = scmp.eq.s32.totalorder %s17, 3
      %p98 = scmp.ne.s32.totalorder %s93, %s95
      %p99 = scmp.eq.s32.totalorder %s17, 0
      %p100 = por %p98, %p99
      %p101 = scmp.ne.s32.totalorder %s93, %s95
      %p102 = scmp.eq.s32.totalorder %s22, 3
      %p103 = por %p101, %p102
      %p104 = scmp.ne.s32.totalorder %s95, %s96
      %p105 = scmp.eq.s32.totalorder %s22, 0
      %p106 = por %p104, %p105
      %p107 = scmp.ne.s32.totalorder %s95, %s96
      %p108 = scmp.eq.s32.totalorder %s23, 3
      %p109 = por %p107, %p108
      %p111 = scmp.ne.s32.totalorder %s96, %s110
      %p112 = scmp.eq.s32.totalorder %s23, 0
      %p113 = por %p111, %p112
      %s115 = sadd.s32 %s114, 1
      %p118 = scmp.eq.s32.totalorder %s17, 3
      %p119 = scmp.ne.s32.totalorder %s114, %s116
      %p120 = scmp.eq.s32.totalorder %s17, 0
      %p121 = por %p119, %p120
      %p122 = scmp.ne.s32.totalorder %s114, %s116
      %p123 = scmp.eq.s32.totalorder %s22, 3
      %p124 = por %p122, %p123
      %p125 = scmp.ne.s32.totalorder %s116, %s117
      %p126 = scmp.eq.s32.totalorder %s22, 0
      %p127 = por %p125, %p126
      %p128 = scmp.ne.s32.totalorder %s116, %s117
      %p129 = scmp.eq.s32.totalorder %s23, 3
      %p130 = por %p128, %p129
      %p132 = scmp.ne.s32.totalorder %s117, %s131
      %p133 = scmp.eq.s32.totalorder %s23, 0
      %p134 = por %p132, %p133
      %s136 = sadd.s32 %s135, 1
      %p139 = scmp.eq.s32.totalorder %s17, 3
      %p140 = scmp.ne.s32.totalorder %s135, %s137
      %p141 = scmp.eq.s32.totalorder %s17, 0
      %p142 = por %p140, %p141
      %p143 = scmp.ne.s32.totalorder %s135, %s137
      %p144 = scmp.eq.s32.totalorder %s22, 3
      %p145 = por %p143, %p144
      %p146 = scmp.ne.s32.totalorder %s137, %s138
      %p147 = scmp.eq.s32.totalorder %s22, 0
      %p148 = por %p146, %p147
      %p149 = scmp.ne.s32.totalorder %s137, %s138
      %p150 = scmp.eq.s32.totalorder %s23, 3
      %p151 = por %p149, %p150
      %p153 = scmp.ne.s32.totalorder %s138, %s152
      %p154 = scmp.eq.s32.totalorder %s23, 0
      %p155 = por %p153, %p154
      %s156 = ssub.s32 %s17, %s24
      %p157 = scmp.eq.s32.totalorder %s156, 0
      %s159 = sadd.s32 %s158, 1
      %s160 = scalar_select %p157, %s158, %s159
      %p163 = pneg %p157
      %p164 = scmp.eq.s32.totalorder %s17, 3
      %p165 = por %p163, %p164
      %p166 = scmp.ne.s32.totalorder %s158, %s161
      %p167 = scmp.eq.s32.totalorder %s17, 0
      %p168 = por %p166, %p167
      %p169 = scmp.ne.s32.totalorder %s158, %s161
      %p170 = scmp.eq.s32.totalorder %s22, 3
      %p171 = por %p169, %p170
      %p172 = scmp.ne.s32.totalorder %s161, %s162
      %p173 = scmp.eq.s32.totalorder %s22, 0
      %p174 = por %p172, %p173
      %p175 = scmp.ne.s32.totalorder %s161, %s162
      %p176 = scmp.eq.s32.totalorder %s23, 3
      %p177 = por %p175, %p176
      %p179 = scmp.ne.s32.totalorder %s162, %s178
      %p180 = scmp.eq.s32.totalorder %s23, 0
      %p181 = por %p179, %p180
      %p182 = scmp.le.s32.totalorder 1, %s17
      %p183 = scmp.lt.s32.totalorder %s17, 5
      %p184 = pnand %p182, %p183
      %p185 = pneg %p184
      // Predicated region
      $region9: #{tpu_custom_call.1} parent=5 // pred_check
        _
      $region10: #{tpu_custom_call.1} parent=5 // pred_check_branch
        %187 = sbr.rel (%p184) target = $region12
      $region11: #{tpu_custom_call.1} parent=5 // pred_region
        %s188 = ssub.s32 %s17, 1
        // Predicated region
        $region13: #{tpu_custom_call.1} parent=11 // pred_check
          %p189 = pneg %p64
        $region14: #{tpu_custom_call.1} parent=11 // pred_check_branch
          %191 = sbr.rel (%p189) target = $region16
        $region15: #{tpu_custom_call.1} parent=11 // pred_region
          _
        $region16: #{tpu_custom_call.1} parent=11 // pred_fallthru
          _
        // Predicated region
        $region17: #{tpu_custom_call.1} parent=11 // pred_check
          %p192 = pneg %p85
        $region18: #{tpu_custom_call.1} parent=11 // pred_check_branch
          %194 = sbr.rel (%p192) target = $region20
        $region19: #{tpu_custom_call.1} parent=11 // pred_region
          %s196 = ssub.s32 5120, 5120
          %197 = vsyncadd [#allocation3], %s196
          %s198 = sshll.u32 [#allocation2], 4
          %s199 = int_to_ptr.vmem [resolvable:$true] %s198
          %204 = dma.hbm_to_vmem [thread:$0]  %s2, 5120, %s199, [#allocation3], 64, 64, 4
        $region20: #{tpu_custom_call.1} parent=11 // pred_fallthru
          _
        // Predicated region
        $region21: #{tpu_custom_call.1} parent=11 // pred_check
          %p205 = pneg %p106
        $region22: #{tpu_custom_call.1} parent=11 // pred_check_branch
          %207 = sbr.rel (%p205) target = $region24
        $region23: #{tpu_custom_call.1} parent=11 // pred_region
          _
        $region24: #{tpu_custom_call.1} parent=11 // pred_fallthru
          _
        // Predicated region
        $region25: #{tpu_custom_call.1} parent=11 // pred_check
          %p208 = pneg %p127
        $region26: #{tpu_custom_call.1} parent=11 // pred_check_branch
          %210 = sbr.rel (%p208) target = $region28
        $region27: #{tpu_custom_call.1} parent=11 // pred_region
          _
        $region28: #{tpu_custom_call.1} parent=11 // pred_fallthru
          _
        // Predicated region
        $region29: #{tpu_custom_call.1} parent=11 // pred_check
          %p211 = pneg %p148
        $region30: #{tpu_custom_call.1} parent=11 // pred_check_branch
          %213 = sbr.rel (%p211) target = $region32
        $region31: #{tpu_custom_call.1} parent=11 // pred_region
          %s215 = ssub.s32 112, 112
          %216 = vsyncadd [#allocation6], %s215
          %s218 = sshll.u32 [#allocation5], 4
          %s219 = int_to_ptr.vmem [resolvable:$true] %s218
          %221 = dma.hbm_to_vmem [thread:$0]  %s5, 112, %s219, [#allocation6]
        $region32: #{tpu_custom_call.1} parent=11 // pred_fallthru
          _
      $region12: #{tpu_custom_call.1} parent=5 // pred_fallthru
        _
      %p222 = scmp.lt.s32.totalorder %s17, 4
      // Predicated region
      $region33: #{tpu_custom_call.1} parent=5 // pred_check
        %p223 = pneg %p222
      $region34: #{tpu_custom_call.1} parent=5 // pred_check_branch
        %225 = sbr.rel (%p223) target = $region36
      $region35: #{tpu_custom_call.1} parent=5 // pred_region
        // Predicated region
        $region37: #{tpu_custom_call.1} parent=35 // pred_check
          %p226 = pneg %p37
        $region38: #{tpu_custom_call.1} parent=35 // pred_check_branch
          %228 = sbr.rel (%p226) target = $region40
        $region39: #{tpu_custom_call.1} parent=35 // pred_region
          %s229 = smul.u32 2, %s17
          %p230 = scmp.lt.s32.totalorder %s229, 7
          %s231 = scalar_select %p230, %s229, 7
          %s232 = smul.addr %s231, 7
          %s233 = smul.addr %s232, 8
          %s234 = scalar_lea.vmem %s0, %s233
          %s235 = smul.u32 2, %s17
        $region40: #{tpu_custom_call.1} parent=35 // pred_fallthru
          _
      $region36: #{tpu_custom_call.1} parent=5 // pred_fallthru
        _
      %p236 = scmp.le.s32.totalorder 1, %s17
      %p237 = scmp.lt.s32.totalorder %s17, 5
      %p238 = pnand %p236, %p237
      %p239 = pneg %p238
      // Predicated region
      $region41: #{tpu_custom_call.1} parent=5 // pred_check
        _
      $region42: #{tpu_custom_call.1} parent=5 // pred_check_branch
        %241 = sbr.rel (%p238) target = $region44
      $region43: #{tpu_custom_call.1} parent=5 // pred_region
        %s242 = ssub.s32 %s17, 1
        // Predicated region
        $region45: #{tpu_custom_call.1} parent=43 // pred_check
          %p243 = pneg %p85
        $region46: #{tpu_custom_call.1} parent=43 // pred_check_branch
          %245 = sbr.rel (%p243) target = $region48
        $region47: #{tpu_custom_call.1} parent=43 // pred_region
          %246 = dma.done [#allocation3], 5120
        $region48: #{tpu_custom_call.1} parent=43 // pred_fallthru
          _
        // Predicated region
        $region49: #{tpu_custom_call.1} parent=43 // pred_check
          %p247 = pneg %p148
        $region50: #{tpu_custom_call.1} parent=43 // pred_check_branch
          %249 = sbr.rel (%p247) target = $region52
        $region51: #{tpu_custom_call.1} parent=43 // pred_region
          %250 = dma.done [#allocation6], 112
        $region52: #{tpu_custom_call.1} parent=43 // pred_fallthru
          _
        %s251 = smul.u32 2, %s22
        %p252 = scmp.lt.s32.totalorder %s251, 7
        %s253 = scalar_select %p252, %s251, 7
        %s254 = smul.addr %s253, 7
        %s255 = smul.addr %s254, 8
        %s256 = scalar_lea.vmem %s0, %s255
        %p257 = pneg %p43
        %p258 = pneg %p40
        %p259 = pneg %p64
        %p260 = pneg %p61
        %p261 = pneg %p85
        %p262 = pneg %p82
        %p263 = pneg %p106
        %p264 = pneg %p103
        %p265 = pneg %p127
        %p266 = pneg %p124
        %p267 = pneg %p148
        %p268 = pneg %p145
        %p269 = pneg %p174
        %p270 = pneg %p171
        %s271 = sand.u32 %s161, 1
        %s272 = scalar_lea.sflag [#allocation4], %s271
        %s273 = sand.u32 %s161, 1
        %s274 = smul.addr %s273, 112
        %s275 = scalar_lea.vmem [#allocation7], %s274
        %s276 = smul.u32 2, %s22
        %p277 = scmp.lt.s32.totalorder %s276, 7
        %s278 = scalar_select %p277, %s276, 7
        %s279 = smul.addr %s278, 7
        %s280 = smul.addr %s279, 8
        %s281 = scalar_lea.vmem %s0, %s280
        %s282 = smul.u32 2, %s22
        %s283 = smul.u32 2, %s22
        %v285 = vld [vmem:[%s281] sm:$0xff]
        %v286 = vld [vmem:[%s281 + $0x8] sm:$0xff]
        %v287 = vld [vmem:[%s281 + $0x10] sm:$0xff]
        %v288 = vld [vmem:[%s281 + $0x18] sm:$0xff]
        %v289 = vld [vmem:[%s281 + $0x20] sm:$0xff]
        %v290 = vld [vmem:[%s281 + $0x28] sm:$0xff]
        %v291 = vld [vmem:[%s281 + $0x30] sm:$0xff]
        %v292 = vld [vmem:[%s281 + $0x38] sm:$0xff]
        %v293 = vld [vmem:[%s281 + $0x40] sm:$0xff]
        %v294 = vld [vmem:[%s281 + $0x48] sm:$0xff]
        %v295 = vld [vmem:[%s281 + $0x50] sm:$0xff]
        %v296 = vld [vmem:[%s281 + $0x58] sm:$0xff]
        %v297 = vld [vmem:[%s281 + $0x60] sm:$0xff]
        %v298 = vld [vmem:[%s281 + $0x68] sm:$0xff]
        %v299 = vpack.c.bf16 %v292, %v285
        %v300 = vpack.c.bf16 %v293, %v286
        %v301 = vpack.c.bf16 %v294, %v287
        %v302 = vpack.c.bf16 %v295, %v288
        %v303 = vpack.c.bf16 %v296, %v289
        %v304 = vpack.c.bf16 %v297, %v290
        %v305 = vpack.c.bf16 %v298, %v291
        %v306 = vld [vmem:[%s1] sm:$0xf]
        %v307 = vld [vmem:[%s1 + $0x4] sm:$0xf]
        %v308 = vld [vmem:[%s1 + $0x8] sm:$0xf]
        %v309 = vld [vmem:[%s1 + $0xc] sm:$0xf]
        %v310 = vld [vmem:[%s1 + $0x10] sm:$0xf]
        %v311 = vld [vmem:[%s1 + $0x14] sm:$0xf]
        %v312 = vld [vmem:[%s1 + $0x18] sm:$0xf]
        %v313 = vld [vmem:[%s1 + $0x1c] sm:$0xf]
        %v314 = vld [vmem:[%s1 + $0x20] sm:$0xf]
        %v315 = vld [vmem:[%s1 + $0x24] sm:$0xf]
        %v316 = vld [vmem:[%s1 + $0x28] sm:$0xf]
        %v317 = vld [vmem:[%s1 + $0x2c] sm:$0xf]
        %v318 = vld [vmem:[%s1 + $0x30] sm:$0xf]
        %v319 = vld [vmem:[%s1 + $0x34] sm:$0xf]
        %v320 = vld [vmem:[%s1 + $0x38] sm:$0xf]
        %v321 = vld [vmem:[%s1 + $0x3c] sm:$0xf]
        %v322 = vld [vmem:[%s1 + $0x40] sm:$0xf]
        %v323 = vld [vmem:[%s1 + $0x44] sm:$0xf]
        %v324 = vld [vmem:[%s1 + $0x48] sm:$0xf]
        %v325 = vld [vmem:[%s1 + $0x4c] sm:$0xf]
        %v326 = vld [vmem:[%s1 + $0x50] sm:$0xf]
        %v327 = vld [vmem:[%s1 + $0x54] sm:$0xf]
        %v328 = vld [vmem:[%s1 + $0x58] sm:$0xf]
        %v329 = vld [vmem:[%s1 + $0x5c] sm:$0xf]
        %v330 = vld [vmem:[%s1 + $0x60] sm:$0xf]
        %v331 = vld [vmem:[%s1 + $0x64] sm:$0xf]
        %v332 = vld [vmem:[%s1 + $0x68] sm:$0xf]
        %v333 = vld [vmem:[%s1 + $0x6c] sm:$0xf]
        %v334 = vld [vmem:[%s1 + $0x70] sm:$0xf]
        %v335 = vld [vmem:[%s1 + $0x74] sm:$0xf]
        %v336 = vld [vmem:[%s1 + $0x78] sm:$0xf]
        %v337 = vld [vmem:[%s1 + $0x7c] sm:$0xf]
        %v338 = vld [vmem:[%s1 + $0x80] sm:$0xf]
        %v339 = vld [vmem:[%s1 + $0x84] sm:$0xf]
        %v340 = vld [vmem:[%s1 + $0x88] sm:$0xf]
        %v341 = vld [vmem:[%s1 + $0x8c] sm:$0xf]
        %v342 = vld [vmem:[%s1 + $0x90] sm:$0xf]
        %v343 = vld [vmem:[%s1 + $0x94] sm:$0xf]
        %v344 = vld [vmem:[%s1 + $0x98] sm:$0xf]
        %v345 = vld [vmem:[%s1 + $0x9c] sm:$0xf]
        %v346 = vld [vmem:[%s1 + $0xa0] sm:$0xf]
        %v347 = vld [vmem:[%s1 + $0xa4] sm:$0xf]
        %v348 = vld [vmem:[%s1 + $0xa8] sm:$0xf]
        %v349 = vld [vmem:[%s1 + $0xac] sm:$0xf]
        %v350 = vld [vmem:[%s1 + $0xb0] sm:$0xf]
        %v351 = vld [vmem:[%s1 + $0xb4] sm:$0xf]
        %v352 = vld [vmem:[%s1 + $0xb8] sm:$0xf]
        %v353 = vld [vmem:[%s1 + $0xbc] sm:$0xf]
        %v354 = vld [vmem:[%s1 + $0xc0] sm:$0xf]
        %v355 = vld [vmem:[%s1 + $0xc4] sm:$0xf]
        %v356 = vld [vmem:[%s1 + $0xc8] sm:$0xf]
        %v357 = vld [vmem:[%s1 + $0xcc] sm:$0xf]
        %v358 = vld [vmem:[%s1 + $0xd0] sm:$0xf]
        %v359 = vld [vmem:[%s1 + $0xd4] sm:$0xf]
        %v360 = vld [vmem:[%s1 + $0xd8] sm:$0xf]
        %v361 = vld [vmem:[%s1 + $0xdc] sm:$0xf]
        %v362 = vld [vmem:[%s1 + $0xe0] sm:$0xf]
        %v363 = vld [vmem:[%s1 + $0xe4] sm:$0xf]
        %v364 = vld [vmem:[%s1 + $0xe8] sm:$0xf]
        %v365 = vld [vmem:[%s1 + $0xec] sm:$0xf]
        %v366 = vld [vmem:[%s1 + $0xf0] sm:$0xf]
        %v367 = vld [vmem:[%s1 + $0xf4] sm:$0xf]
        %v368 = vld [vmem:[%s1 + $0xf8] sm:$0xf]
        %v369 = vld [vmem:[%s1 + $0xfc] sm:$0xf]
        %v370 = vld [vmem:[%s1 + $0x100] sm:$0xf]
        %v371 = vld [vmem:[%s1 + $0x104] sm:$0xf]
        %v372 = vld [vmem:[%s1 + $0x108] sm:$0xf]
        %v373 = vld [vmem:[%s1 + $0x10c] sm:$0xf]
        %v374 = vld [vmem:[%s1 + $0x110] sm:$0xf]
        %v375 = vld [vmem:[%s1 + $0x114] sm:$0xf]
        %v376 = vld [vmem:[%s1 + $0x118] sm:$0xf]
        %v377 = vld [vmem:[%s1 + $0x11c] sm:$0xf]
        %v378 = vld [vmem:[%s1 + $0x120] sm:$0xf]
        %v379 = vld [vmem:[%s1 + $0x124] sm:$0xf]
        %v380 = vld [vmem:[%s1 + $0x128] sm:$0xf]
        %v381 = vld [vmem:[%s1 + $0x12c] sm:$0xf]
        %v382 = vld [vmem:[%s1 + $0x130] sm:$0xf]
        %v383 = vld [vmem:[%s1 + $0x134] sm:$0xf]
        %v384 = vld [vmem:[%s1 + $0x138] sm:$0xf]
        %v385 = vld [vmem:[%s1 + $0x13c] sm:$0xf]
        %v386 = vld [vmem:[%s1 + $0x140] sm:$0xf]
        %v387 = vld [vmem:[%s1 + $0x144] sm:$0xf]
        %v388 = vld [vmem:[%s1 + $0x148] sm:$0xf]
        %v389 = vld [vmem:[%s1 + $0x14c] sm:$0xf]
        %v390 = vld [vmem:[%s1 + $0x150] sm:$0xf]
        %v391 = vld [vmem:[%s1 + $0x154] sm:$0xf]
        %v392 = vld [vmem:[%s1 + $0x158] sm:$0xf]
        %v393 = vld [vmem:[%s1 + $0x15c] sm:$0xf]
        %v394 = vld [vmem:[%s1 + $0x160] sm:$0xf]
        %v395 = vld [vmem:[%s1 + $0x164] sm:$0xf]
        %v396 = vld [vmem:[%s1 + $0x168] sm:$0xf]
        %v397 = vld [vmem:[%s1 + $0x16c] sm:$0xf]
        %v398 = vld [vmem:[%s1 + $0x170] sm:$0xf]
        %v399 = vld [vmem:[%s1 + $0x174] sm:$0xf]
        %v400 = vld [vmem:[%s1 + $0x178] sm:$0xf]
        %v401 = vld [vmem:[%s1 + $0x17c] sm:$0xf]
        %v402 = vld [vmem:[%s1 + $0x180] sm:$0xf]
        %v403 = vld [vmem:[%s1 + $0x184] sm:$0xf]
        %v404 = vld [vmem:[%s4] sm:$0x1]
        %v405 = vlaneseq
        %v406 = vshrl.u32 %v405, 7
        %v407 = vsub.s32 0, %v406
        %v408 = vrot.slane %v404, %v407
        %v507 = vunpack.c.l.b16 %v306
        %v508 = vunpack.c.l.b16 %v307
        %v509 = vunpack.c.l.b16 %v308
        %v510 = vunpack.c.l.b16 %v309
        %v511 = vunpack.c.l.b16 %v310
        %v512 = vunpack.c.l.b16 %v311
        %v513 = vunpack.c.l.b16 %v312
        %v514 = vunpack.c.l.b16 %v313
        %v515 = vunpack.c.l.b16 %v314
        %v516 = vunpack.c.l.b16 %v315
        %v517 = vunpack.c.l.b16 %v316
        %v518 = vunpack.c.l.b16 %v317
        %v519 = vunpack.c.l.b16 %v318
        %v520 = vunpack.c.l.b16 %v319
        %v521 = vunpack.c.l.b16 %v320
        %v522 = vunpack.c.l.b16 %v321
        %v523 = vunpack.c.l.b16 %v322
        %v524 = vunpack.c.l.b16 %v323
        %v525 = vunpack.c.l.b16 %v324
        %v526 = vunpack.c.l.b16 %v325
        %v527 = vunpack.c.l.b16 %v326
        %v528 = vunpack.c.l.b16 %v327
        %v529 = vunpack.c.l.b16 %v328
        %v530 = vunpack.c.l.b16 %v329
        %v531 = vunpack.c.l.b16 %v330
        %v532 = vunpack.c.l.b16 %v331
        %v533 = vunpack.c.l.b16 %v332
        %v534 = vunpack.c.l.b16 %v333
        %v535 = vunpack.c.l.b16 %v334
        %v536 = vunpack.c.l.b16 %v335
        %v537 = vunpack.c.l.b16 %v336
        %v538 = vunpack.c.l.b16 %v337
        %v539 = vunpack.c.l.b16 %v338
        %v540 = vunpack.c.l.b16 %v339
        %v541 = vunpack.c.l.b16 %v340
        %v542 = vunpack.c.l.b16 %v341
        %v543 = vunpack.c.l.b16 %v342
        %v544 = vunpack.c.l.b16 %v343
        %v545 = vunpack.c.l.b16 %v344
        %v546 = vunpack.c.l.b16 %v345
        %v547 = vunpack.c.l.b16 %v346
        %v548 = vunpack.c.l.b16 %v347
        %v549 = vunpack.c.l.b16 %v348
        %v550 = vunpack.c.l.b16 %v349
        %v551 = vunpack.c.l.b16 %v350
        %v552 = vunpack.c.l.b16 %v351
        %v553 = vunpack.c.l.b16 %v352
        %v554 = vunpack.c.l.b16 %v353
        %v555 = vunpack.c.l.b16 %v354
        %v556 = vunpack.c.l.b16 %v355
        %v557 = vunpack.c.l.b16 %v356
        %v558 = vunpack.c.l.b16 %v357
        %v559 = vunpack.c.l.b16 %v358
        %v560 = vunpack.c.l.b16 %v359
        %v561 = vunpack.c.l.b16 %v360
        %v562 = vunpack.c.l.b16 %v361
        %v563 = vunpack.c.l.b16 %v362
        %v564 = vunpack.c.l.b16 %v363
        %v565 = vunpack.c.l.b16 %v364
        %v566 = vunpack.c.l.b16 %v365
        %v567 = vunpack.c.l.b16 %v366
        %v568 = vunpack.c.l.b16 %v367
        %v569 = vunpack.c.l.b16 %v368
        %v570 = vunpack.c.l.b16 %v369
        %v571 = vunpack.c.l.b16 %v370
        %v572 = vunpack.c.l.b16 %v371
        %v573 = vunpack.c.l.b16 %v372
        %v574 = vunpack.c.l.b16 %v373
        %v575 = vunpack.c.l.b16 %v374
        %v576 = vunpack.c.l.b16 %v375
        %v577 = vunpack.c.l.b16 %v376
        %v578 = vunpack.c.l.b16 %v377
        %v579 = vunpack.c.l.b16 %v378
        %v580 = vunpack.c.l.b16 %v379
        %v581 = vunpack.c.l.b16 %v380
        %v582 = vunpack.c.l.b16 %v381
        %v583 = vunpack.c.l.b16 %v382
        %v584 = vunpack.c.l.b16 %v383
        %v585 = vunpack.c.l.b16 %v384
        %v586 = vunpack.c.l.b16 %v385
        %v587 = vunpack.c.l.b16 %v386
        %v588 = vunpack.c.l.b16 %v387
        %v589 = vunpack.c.l.b16 %v388
        %v590 = vunpack.c.l.b16 %v389
        %v591 = vunpack.c.l.b16 %v390
        %v592 = vunpack.c.l.b16 %v391
        %v593 = vunpack.c.l.b16 %v392
        %v594 = vunpack.c.l.b16 %v393
        %v595 = vunpack.c.l.b16 %v394
        %v596 = vunpack.c.l.b16 %v395
        %v597 = vunpack.c.l.b16 %v396
        %v598 = vunpack.c.l.b16 %v397
        %v599 = vunpack.c.l.b16 %v398
        %v600 = vunpack.c.l.b16 %v399
        %v601 = vunpack.c.l.b16 %v400
        %v602 = vunpack.c.l.b16 %v401
        %v603 = vunpack.c.l.b16 %v402
        %v604 = vunpack.c.l.b16 %v403
        %v605 = vpack.c.b16 %v508, %v507
        %v606 = vpack.c.b16 %v510, %v509
        %v607 = vpack.c.b16 %v512, %v511
        %v608 = vpack.c.b16 %v514, %v513
        %v609 = vpack.c.b16 %v516, %v515
        %v610 = vpack.c.b16 %v518, %v517
        %v611 = vpack.c.b16 %v520, %v519
        %v612 = vpack.c.b16 %v522, %v521
        %v613 = vpack.c.b16 %v524, %v523
        %v614 = vpack.c.b16 %v526, %v525
        %v615 = vpack.c.b16 %v528, %v527
        %v616 = vpack.c.b16 %v530, %v529
        %v617 = vpack.c.b16 %v532, %v531
        %v618 = vpack.c.b16 %v534, %v533
        %v619 = vpack.c.b16 %v536, %v535
        %v620 = vpack.c.b16 %v538, %v537
        %v621 = vpack.c.b16 %v540, %v539
        %v622 = vpack.c.b16 %v542, %v541
        %v623 = vpack.c.b16 %v544, %v543
        %v624 = vpack.c.b16 %v546, %v545
        %v625 = vpack.c.b16 %v548, %v547
        %v626 = vpack.c.b16 %v550, %v549
        %v627 = vpack.c.b16 %v552, %v551
        %v628 = vpack.c.b16 %v554, %v553
        %v629 = vpack.c.b16 %v556, %v555
        %v630 = vpack.c.b16 %v558, %v557
        %v631 = vpack.c.b16 %v560, %v559
        %v632 = vpack.c.b16 %v562, %v561
        %v633 = vpack.c.b16 %v564, %v563
        %v634 = vpack.c.b16 %v566, %v565
        %v635 = vpack.c.b16 %v568, %v567
        %v636 = vpack.c.b16 %v570, %v569
        %v637 = vpack.c.b16 %v572, %v571
        %v638 = vpack.c.b16 %v574, %v573
        %v639 = vpack.c.b16 %v576, %v575
        %v640 = vpack.c.b16 %v578, %v577
        %v641 = vpack.c.b16 %v580, %v579
        %v642 = vpack.c.b16 %v582, %v581
        %v643 = vpack.c.b16 %v584, %v583
        %v644 = vpack.c.b16 %v586, %v585
        %v645 = vpack.c.b16 %v588, %v587
        %v646 = vpack.c.b16 %v590, %v589
        %v647 = vpack.c.b16 %v592, %v591
        %v648 = vpack.c.b16 %v594, %v593
        %v649 = vpack.c.b16 %v596, %v595
        %v650 = vpack.c.b16 %v598, %v597
        %v651 = vpack.c.b16 %v600, %v599
        %v652 = vpack.c.b16 %v602, %v601
        %v653 = vpack.c.b16 %v604, %v603
        %vm703 = vcmask 130048
        %v705 = vsel %vm703, %v305, 0
        %707 = vmatprep.subr.bf16.mxu0 0
        %708 = vmatpush1.bf16.msra.mxu0 %v605
        %709 = vmatprep.subr.bf16.mxu0 0
        %710 = vmatpush1.bf16.msra.mxu0 %v606
        %711 = vmatprep.subr.bf16.mxu0 0
        %712 = vmatpush1.bf16.msra.mxu0 %v607
        %713 = vmatprep.subr.bf16.mxu0 0
        %714 = vmatpush1.bf16.msra.mxu0 %v608
        %715 = vmatprep.subr.bf16.mxu0 0
        %716 = vmatpush1.bf16.msra.mxu0 %v609
        %717 = vmatprep.subr.bf16.mxu0 0
        %718 = vmatpush1.bf16.msra.mxu0 %v610
        %719 = vmatprep.subr.bf16.mxu0 0
        %720 = vmatpush1.bf16.msra.mxu0 %v611
        %721 = vmatprep.subr.bf16.mxu0 0
        %722 = vmatpush1.bf16.msra.mxu0 %v612
        %723 = vmatprep.subr.bf16.mxu0 0
        %724 = vmatpush1.bf16.msra.mxu0 %v613
        %725 = vmatprep.subr.bf16.mxu0 0
        %726 = vmatpush1.bf16.msra.mxu0 %v614
        %727 = vmatprep.subr.bf16.mxu0 0
        %728 = vmatpush1.bf16.msra.mxu0 %v615
        %729 = vmatprep.subr.bf16.mxu0 0
        %730 = vmatpush1.bf16.msra.mxu0 %v616
        %731 = vmatprep.subr.bf16.mxu0 0
        %732 = vmatpush1.bf16.msra.mxu0 %v617
        %733 = vmatprep.subr.bf16.mxu0 0
        %734 = vmatpush1.bf16.msra.mxu0 %v618
        %735 = vmatprep.subr.bf16.mxu0 0
        %736 = vmatpush1.bf16.msra.mxu0 %v619
        %737 = vmatprep.subr.bf16.mxu0 0
        %738 = vmatpush1.bf16.msra.mxu0 %v620
        %739 = vmatprep.mubr.bf16.mxu0 %v300
        %740 = vmatmul.mubr.bf16.gmra.mrb[0].mxu0 %v299
        %v741 = vpop.f32.mrb[0].mxu0
        %v742 = vadd.f32 %v408, %v741
        %v743 = vpop.f32.mrb[0].mxu0
        %v744 = vpop.f32.mrb[0].mxu0
        %v745 = vadd.f32 %v408, %v744
        %v746 = vpop.f32.mrb[0].mxu0
        %747 = vdwg.mxu0
        %748 = vmatprep.subr.bf16.mxu0 0
        %749 = vmatpush1.bf16.msra.mxu0 %v621
        %750 = vmatprep.subr.bf16.mxu0 0
        %751 = vmatpush1.bf16.msra.mxu0 %v622
        %752 = vmatprep.subr.bf16.mxu0 0
        %753 = vmatpush1.bf16.msra.mxu0 %v623
        %754 = vmatprep.subr.bf16.mxu0 0
        %755 = vmatpush1.bf16.msra.mxu0 %v624
        %756 = vmatprep.subr.bf16.mxu0 0
        %757 = vmatpush1.bf16.msra.mxu0 %v625
        %758 = vmatprep.subr.bf16.mxu0 0
        %759 = vmatpush1.bf16.msra.mxu0 %v626
        %760 = vmatprep.subr.bf16.mxu0 0
        %761 = vmatpush1.bf16.msra.mxu0 %v627
        %762 = vmatprep.subr.bf16.mxu0 0
        %763 = vmatpush1.bf16.msra.mxu0 %v628
        %764 = vmatprep.subr.bf16.mxu0 0
        %765 = vmatpush1.bf16.msra.mxu0 %v629
        %766 = vmatprep.subr.bf16.mxu0 0
        %767 = vmatpush1.bf16.msra.mxu0 %v630
        %768 = vmatprep.subr.bf16.mxu0 0
        %769 = vmatpush1.bf16.msra.mxu0 %v631
        %770 = vmatprep.subr.bf16.mxu0 0
        %771 = vmatpush1.bf16.msra.mxu0 %v632
        %772 = vmatprep.subr.bf16.mxu0 0
        %773 = vmatpush1.bf16.msra.mxu0 %v633
        %774 = vmatprep.subr.bf16.mxu0 0
        %775 = vmatpush1.bf16.msra.mxu0 %v634
        %776 = vmatprep.subr.bf16.mxu0 0
        %777 = vmatpush1.bf16.msra.mxu0 %v635
        %778 = vmatprep.subr.bf16.mxu0 0
        %779 = vmatpush1.bf16.msra.mxu0 %v636
        %780 = vmatprep.mubr.bf16.mxu0 %v302
        %781 = vmatmul.mubr.bf16.gmra.mrb[0].mxu0 %v301
        %v782 = vpop.f32.mrb[0].mxu0
        %v783 = vadd.f32 %v742, %v782
        %v784 = vpop.f32.mrb[0].mxu0
        %v785 = vpop.f32.mrb[0].mxu0
        %v786 = vadd.f32 %v745, %v785
        %v787 = vpop.f32.mrb[0].mxu0
        %788 = vdwg.mxu0
        %789 = vmatprep.subr.bf16.mxu0 0
        %790 = vmatpush1.bf16.msra.mxu0 %v637
        %791 = vmatprep.subr.bf16.mxu0 0
        %792 = vmatpush1.bf16.msra.mxu0 %v638
        %793 = vmatprep.subr.bf16.mxu0 0
        %794 = vmatpush1.bf16.msra.mxu0 %v639
        %795 = vmatprep.subr.bf16.mxu0 0
        %796 = vmatpush1.bf16.msra.mxu0 %v640
        %797 = vmatprep.subr.bf16.mxu0 0
        %798 = vmatpush1.bf16.msra.mxu0 %v641
        %799 = vmatprep.subr.bf16.mxu0 0
        %800 = vmatpush1.bf16.msra.mxu0 %v642
        %801 = vmatprep.subr.bf16.mxu0 0
        %802 = vmatpush1.bf16.msra.mxu0 %v643
        %803 = vmatprep.subr.bf16.mxu0 0
        %804 = vmatpush1.bf16.msra.mxu0 %v644
        %805 = vmatprep.subr.bf16.mxu0 0
        %806 = vmatpush1.bf16.msra.mxu0 %v645
        %807 = vmatprep.subr.bf16.mxu0 0
        %808 = vmatpush1.bf16.msra.mxu0 %v646
        %809 = vmatprep.subr.bf16.mxu0 0
        %810 = vmatpush1.bf16.msra.mxu0 %v647
        %811 = vmatprep.subr.bf16.mxu0 0
        %812 = vmatpush1.bf16.msra.mxu0 %v648
        %813 = vmatprep.subr.bf16.mxu0 0
        %814 = vmatpush1.bf16.msra.mxu0 %v649
        %815 = vmatprep.subr.bf16.mxu0 0
        %816 = vmatpush1.bf16.msra.mxu0 %v650
        %817 = vmatprep.subr.bf16.mxu0 0
        %818 = vmatpush1.bf16.msra.mxu0 %v651
        %819 = vmatprep.subr.bf16.mxu0 0
        %820 = vmatpush1.bf16.msra.mxu0 %v652
        %821 = vmatprep.mubr.bf16.mxu0 %v304
        %822 = vmatmul.mubr.bf16.gmra.mrb[0].mxu0 %v303
        %v823 = vpop.f32.mrb[0].mxu0
        %v824 = vadd.f32 %v783, %v823
        %v825 = vpop.f32.mrb[0].mxu0
        %v826 = vpop.f32.mrb[0].mxu0
        %v827 = vadd.f32 %v786, %v826
        %v828 = vpop.f32.mrb[0].mxu0
        %829 = vdwg.mxu0
        %830 = vmatprep.subr.bf16.mxu0 0
        %831 = vmatpush1.bf16.msra.mxu0 %v653
        %832 = vmatprep.subr.bf16.mxu0 0
        %833 = vmatpush1.bf16.msra.mxu0 0
        %834 = vmatprep.subr.bf16.mxu0 0
        %835 = vmatpush1.bf16.msra.mxu0 0
        %836 = vmatprep.subr.bf16.mxu0 0
        %837 = vmatpush1.bf16.msra.mxu0 0
        %838 = vmatprep.subr.bf16.mxu0 0
        %839 = vmatpush1.bf16.msra.mxu0 0
        %840 = vmatprep.subr.bf16.mxu0 0
        %841 = vmatpush1.bf16.msra.mxu0 0
        %842 = vmatprep.subr.bf16.mxu0 0
        %843 = vmatpush1.bf16.msra.mxu0 0
        %844 = vmatprep.subr.bf16.mxu0 0
        %845 = vmatpush1.bf16.msra.mxu0 0
        %846 = vmatprep.subr.bf16.mxu0 0
        %847 = vmatpush1.bf16.msra.mxu0 0
        %848 = vmatprep.subr.bf16.mxu0 0
        %849 = vmatpush1.bf16.msra.mxu0 0
        %850 = vmatprep.subr.bf16.mxu0 0
        %851 = vmatpush1.bf16.msra.mxu0 0
        %852 = vmatprep.subr.bf16.mxu0 0
        %853 = vmatpush1.bf16.msra.mxu0 0
        %854 = vmatprep.subr.bf16.mxu0 0
        %855 = vmatpush1.bf16.msra.mxu0 0
        %856 = vmatprep.subr.bf16.mxu0 0
        %857 = vmatpush1.bf16.msra.mxu0 0
        %858 = vmatprep.subr.bf16.mxu0 0
        %859 = vmatpush1.bf16.msra.mxu0 0
        %860 = vmatprep.subr.bf16.mxu0 0
        %861 = vmatpush1.bf16.msra.mxu0 0
        %862 = vmatprep.mubr.bf16.mxu0 0
        %863 = vmatmul.mubr.bf16.gmra.mrb[0].mxu0 %v705
        %v864 = vpop.f32.mrb[0].mxu0
        %v865 = vadd.f32 %v824, %v864
        %v866 = vpop.f32.mrb[0].mxu0
        %v867 = vpop.f32.mrb[0].mxu0
        %v868 = vadd.f32 %v827, %v867
        %v869 = vpop.f32.mrb[0].mxu0
        %870 = vdwg.mxu0
        %v871 = vmax.f32 %v865, 0.0
        %v872 = vmax.f32 %v868, 0.0
        %v873 = vpack.c.bf16 %v872, %v871
        %v874 = vld [vmem:[#allocation2] sm:$0xf]
        %v875 = vld [vmem:[#allocation2 + $0x4] sm:$0xf]
        %v876 = vld [vmem:[#allocation2 + $0x8] sm:$0xf]
        %v877 = vld [vmem:[#allocation2 + $0xc] sm:$0xf]
        %v878 = vld [vmem:[#allocation2 + $0x10] sm:$0xf]
        %v879 = vld [vmem:[#allocation2 + $0x14] sm:$0xf]
        %v880 = vld [vmem:[#allocation2 + $0x18] sm:$0xf]
        %v881 = vld [vmem:[#allocation2 + $0x1c] sm:$0xf]
        %v882 = vld [vmem:[#allocation2 + $0x20] sm:$0xf]
        %v883 = vld [vmem:[#allocation2 + $0x24] sm:$0xf]
        %v884 = vld [vmem:[#allocation2 + $0x28] sm:$0xf]
        %v885 = vld [vmem:[#allocation2 + $0x2c] sm:$0xf]
        %v886 = vld [vmem:[#allocation2 + $0x30] sm:$0xf]
        %v887 = vld [vmem:[#allocation2 + $0x34] sm:$0xf]
        %v888 = vld [vmem:[#allocation2 + $0x38] sm:$0xf]
        %v889 = vld [vmem:[#allocation2 + $0x3c] sm:$0xf]
        %v890 = vld [vmem:[%s4 + $0x1] sm:$0x1]
        %v891 = vlaneseq
        %v892 = vshrl.u32 %v891, 7
        %v893 = vsub.s32 0, %v892
        %v894 = vrot.slane %v890, %v893
        %v911 = vunpack.c.l.b16 %v874
        %v912 = vunpack.c.l.b16 %v875
        %v913 = vunpack.c.l.b16 %v876
        %v914 = vunpack.c.l.b16 %v877
        %v915 = vunpack.c.l.b16 %v878
        %v916 = vunpack.c.l.b16 %v879
        %v917 = vunpack.c.l.b16 %v880
        %v918 = vunpack.c.l.b16 %v881
        %v919 = vunpack.c.l.b16 %v882
        %v920 = vunpack.c.l.b16 %v883
        %v921 = vunpack.c.l.b16 %v884
        %v922 = vunpack.c.l.b16 %v885
        %v923 = vunpack.c.l.b16 %v886
        %v924 = vunpack.c.l.b16 %v887
        %v925 = vunpack.c.l.b16 %v888
        %v926 = vunpack.c.l.b16 %v889
        %v927 = vpack.c.b16 %v912, %v911
        %v928 = vpack.c.b16 %v914, %v913
        %v929 = vpack.c.b16 %v916, %v915
        %v930 = vpack.c.b16 %v918, %v917
        %v931 = vpack.c.b16 %v920, %v919
        %v932 = vpack.c.b16 %v922, %v921
        %v933 = vpack.c.b16 %v924, %v923
        %v934 = vpack.c.b16 %v926, %v925
        %943 = vmatprep.subr.bf16.mxu0 0
        %944 = vmatpush1.bf16.msra.mxu0 %v927
        %945 = vmatprep.subr.bf16.mxu0 0
        %946 = vmatpush1.bf16.msra.mxu0 %v928
        %947 = vmatprep.subr.bf16.mxu0 0
        %948 = vmatpush1.bf16.msra.mxu0 %v929
        %949 = vmatprep.subr.bf16.mxu0 0
        %950 = vmatpush1.bf16.msra.mxu0 %v930
        %951 = vmatprep.subr.bf16.mxu0 0
        %952 = vmatpush1.bf16.msra.mxu0 %v931
        %953 = vmatprep.subr.bf16.mxu0 0
        %954 = vmatpush1.bf16.msra.mxu0 %v932
        %955 = vmatprep.subr.bf16.mxu0 0
        %956 = vmatpush1.bf16.msra.mxu0 %v933
        %957 = vmatprep.subr.bf16.mxu0 0
        %958 = vmatpush1.bf16.msra.mxu0 %v934
        %959 = vmatprep.subr.bf16.mxu0 0
        %960 = vmatpush1.bf16.msra.mxu0 0
        %961 = vmatprep.subr.bf16.mxu0 0
        %962 = vmatpush1.bf16.msra.mxu0 0
        %963 = vmatprep.subr.bf16.mxu0 0
        %964 = vmatpush1.bf16.msra.mxu0 0
        %965 = vmatprep.subr.bf16.mxu0 0
        %966 = vmatpush1.bf16.msra.mxu0 0
        %967 = vmatprep.subr.bf16.mxu0 0
        %968 = vmatpush1.bf16.msra.mxu0 0
        %969 = vmatprep.subr.bf16.mxu0 0
        %970 = vmatpush1.bf16.msra.mxu0 0
        %971 = vmatprep.subr.bf16.mxu0 0
        %972 = vmatpush1.bf16.msra.mxu0 0
        %973 = vmatprep.subr.bf16.mxu0 0
        %974 = vmatpush1.bf16.msra.mxu0 0
        %975 = vmatprep.mubr.bf16.mxu0 0
        %976 = vmatmul.mubr.bf16.gmra.mrb[0].mxu0 %v873
        %v977 = vpop.f32.mrb[0].mxu0
        %v978 = vadd.f32 %v894, %v977
        %v979 = vpop.f32.mrb[0].mxu0
        %v980 = vpop.f32.mrb[0].mxu0
        %v981 = vadd.f32 %v894, %v980
        %v982 = vpop.f32.mrb[0].mxu0
        %983 = vdwg.mxu0
        %v984 = vmax.f32 %v978, 0.0
        %v985 = vmax.f32 %v981, 0.0
        %v986 = vpack.c.bf16 %v985, %v984
        %s987 = scalar_lea.vmem [#allocation2], 64
        %v988 = vld [vmem:[%s987] sm:$0xf]
        %v989 = vld [vmem:[%s987 + $0x4] sm:$0xf]
        %v990 = vld [vmem:[%s987 + $0x8] sm:$0xf]
        %v991 = vld [vmem:[%s987 + $0xc] sm:$0xf]
        %v992 = vld [vmem:[%s987 + $0x10] sm:$0xf]
        %v993 = vld [vmem:[%s987 + $0x14] sm:$0xf]
        %v994 = vld [vmem:[%s987 + $0x18] sm:$0xf]
        %v995 = vld [vmem:[%s987 + $0x1c] sm:$0xf]
        %v996 = vld [vmem:[%s987 + $0x20] sm:$0xf]
        %v997 = vld [vmem:[%s987 + $0x24] sm:$0xf]
        %v998 = vld [vmem:[%s987 + $0x28] sm:$0xf]
        %v999 = vld [vmem:[%s987 + $0x2c] sm:$0xf]
        %v1000 = vld [vmem:[%s987 + $0x30] sm:$0xf]
        %v1001 = vld [vmem:[%s987 + $0x34] sm:$0xf]
        %v1002 = vld [vmem:[%s987 + $0x38] sm:$0xf]
        %v1003 = vld [vmem:[%s987 + $0x3c] sm:$0xf]
        %v1004 = vld [vmem:[%s4 + $0x2] sm:$0x1]
        %v1005 = vlaneseq
        %v1006 = vshrl.u32 %v1005, 7
        %v1007 = vsub.s32 0, %v1006
        %v1008 = vrot.slane %v1004, %v1007
        %v1025 = vunpack.c.l.b16 %v988
        %v1026 = vunpack.c.l.b16 %v989
        %v1027 = vunpack.c.l.b16 %v990
        %v1028 = vunpack.c.l.b16 %v991
        %v1029 = vunpack.c.l.b16 %v992
        %v1030 = vunpack.c.l.b16 %v993
        %v1031 = vunpack.c.l.b16 %v994
        %v1032 = vunpack.c.l.b16 %v995
        %v1033 = vunpack.c.l.b16 %v996
        %v1034 = vunpack.c.l.b16 %v997
        %v1035 = vunpack.c.l.b16 %v998
        %v1036 = vunpack.c.l.b16 %v999
        %v1037 = vunpack.c.l.b16 %v1000
        %v1038 = vunpack.c.l.b16 %v1001
        %v1039 = vunpack.c.l.b16 %v1002
        %v1040 = vunpack.c.l.b16 %v1003
        %v1041 = vpack.c.b16 %v1026, %v1025
        %v1042 = vpack.c.b16 %v1028, %v1027
        %v1043 = vpack.c.b16 %v1030, %v1029
        %v1044 = vpack.c.b16 %v1032, %v1031
        %v1045 = vpack.c.b16 %v1034, %v1033
        %v1046 = vpack.c.b16 %v1036, %v1035
        %v1047 = vpack.c.b16 %v1038, %v1037
        %v1048 = vpack.c.b16 %v1040, %v1039
        %1057 = vmatprep.subr.bf16.mxu0 0
        %1058 = vmatpush1.bf16.msra.mxu0 %v1041
        %1059 = vmatprep.subr.bf16.mxu0 0
        %1060 = vmatpush1.bf16.msra.mxu0 %v1042
        %1061 = vmatprep.subr.bf16.mxu0 0
        %1062 = vmatpush1.bf16.msra.mxu0 %v1043
        %1063 = vmatprep.subr.bf16.mxu0 0
        %1064 = vmatpush1.bf16.msra.mxu0 %v1044
        %1065 = vmatprep.subr.bf16.mxu0 0
        %1066 = vmatpush1.bf16.msra.mxu0 %v1045
        %1067 = vmatprep.subr.bf16.mxu0 0
        %1068 = vmatpush1.bf16.msra.mxu0 %v1046
        %1069 = vmatprep.subr.bf16.mxu0 0
        %1070 = vmatpush1.bf16.msra.mxu0 %v1047
        %1071 = vmatprep.subr.bf16.mxu0 0
        %1072 = vmatpush1.bf16.msra.mxu0 %v1048
        %1073 = vmatprep.subr.bf16.mxu0 0
        %1074 = vmatpush1.bf16.msra.mxu0 0
        %1075 = vmatprep.subr.bf16.mxu0 0
        %1076 = vmatpush1.bf16.msra.mxu0 0
        %1077 = vmatprep.subr.bf16.mxu0 0
        %1078 = vmatpush1.bf16.msra.mxu0 0
        %1079 = vmatprep.subr.bf16.mxu0 0
        %1080 = vmatpush1.bf16.msra.mxu0 0
        %1081 = vmatprep.subr.bf16.mxu0 0
        %1082 = vmatpush1.bf16.msra.mxu0 0
        %1083 = vmatprep.subr.bf16.mxu0 0
        %1084 = vmatpush1.bf16.msra.mxu0 0
        %1085 = vmatprep.subr.bf16.mxu0 0
        %1086 = vmatpush1.bf16.msra.mxu0 0
        %1087 = vmatprep.subr.bf16.mxu0 0
        %1088 = vmatpush1.bf16.msra.mxu0 0
        %1089 = vmatprep.mubr.bf16.mxu0 0
        %1090 = vmatmul.mubr.bf16.gmra.mrb[0].mxu0 %v986
        %v1091 = vpop.f32.mrb[0].mxu0
        %v1092 = vadd.f32 %v1008, %v1091
        %v1093 = vpop.f32.mrb[0].mxu0
        %v1094 = vpop.f32.mrb[0].mxu0
        %v1095 = vadd.f32 %v1008, %v1094
        %v1096 = vpop.f32.mrb[0].mxu0
        %1097 = vdwg.mxu0
        %v1098 = vmax.f32 %v1092, 0.0
        %v1099 = vmax.f32 %v1095, 0.0
        %v1100 = vpack.c.bf16 %v1099, %v1098
        %s1101 = scalar_lea.vmem [#allocation2], 128
        %v1102 = vld [vmem:[%s1101] sm:$0xf]
        %v1103 = vld [vmem:[%s1101 + $0x4] sm:$0xf]
        %v1104 = vld [vmem:[%s1101 + $0x8] sm:$0xf]
        %v1105 = vld [vmem:[%s1101 + $0xc] sm:$0xf]
        %v1106 = vld [vmem:[%s1101 + $0x10] sm:$0xf]
        %v1107 = vld [vmem:[%s1101 + $0x14] sm:$0xf]
        %v1108 = vld [vmem:[%s1101 + $0x18] sm:$0xf]
        %v1109 = vld [vmem:[%s1101 + $0x1c] sm:$0xf]
        %v1110 = vld [vmem:[%s1101 + $0x20] sm:$0xf]
        %v1111 = vld [vmem:[%s1101 + $0x24] sm:$0xf]
        %v1112 = vld [vmem:[%s1101 + $0x28] sm:$0xf]
        %v1113 = vld [vmem:[%s1101 + $0x2c] sm:$0xf]
        %v1114 = vld [vmem:[%s1101 + $0x30] sm:$0xf]
        %v1115 = vld [vmem:[%s1101 + $0x34] sm:$0xf]
        %v1116 = vld [vmem:[%s1101 + $0x38] sm:$0xf]
        %v1117 = vld [vmem:[%s1101 + $0x3c] sm:$0xf]
        %v1118 = vld [vmem:[%s4 + $0x3] sm:$0x1]
        %v1119 = vlaneseq
        %v1120 = vshrl.u32 %v1119, 7
        %v1121 = vsub.s32 0, %v1120
        %v1122 = vrot.slane %v1118, %v1121
        %v1139 = vunpack.c.l.b16 %v1102
        %v1140 = vunpack.c.l.b16 %v1103
        %v1141 = vunpack.c.l.b16 %v1104
        %v1142 = vunpack.c.l.b16 %v1105
        %v1143 = vunpack.c.l.b16 %v1106
        %v1144 = vunpack.c.l.b16 %v1107
        %v1145 = vunpack.c.l.b16 %v1108
        %v1146 = vunpack.c.l.b16 %v1109
        %v1147 = vunpack.c.l.b16 %v1110
        %v1148 = vunpack.c.l.b16 %v1111
        %v1149 = vunpack.c.l.b16 %v1112
        %v1150 = vunpack.c.l.b16 %v1113
        %v1151 = vunpack.c.l.b16 %v1114
        %v1152 = vunpack.c.l.b16 %v1115
        %v1153 = vunpack.c.l.b16 %v1116
        %v1154 = vunpack.c.l.b16 %v1117
        %v1155 = vpack.c.b16 %v1140, %v1139
        %v1156 = vpack.c.b16 %v1142, %v1141
        %v1157 = vpack.c.b16 %v1144, %v1143
        %v1158 = vpack.c.b16 %v1146, %v1145
        %v1159 = vpack.c.b16 %v1148, %v1147
        %v1160 = vpack.c.b16 %v1150, %v1149
        %v1161 = vpack.c.b16 %v1152, %v1151
        %v1162 = vpack.c.b16 %v1154, %v1153
        %1171 = vmatprep.subr.bf16.mxu0 0
        %1172 = vmatpush1.bf16.msra.mxu0 %v1155
        %1173 = vmatprep.subr.bf16.mxu0 0
        %1174 = vmatpush1.bf16.msra.mxu0 %v1156
        %1175 = vmatprep.subr.bf16.mxu0 0
        %1176 = vmatpush1.bf16.msra.mxu0 %v1157
        %1177 = vmatprep.subr.bf16.mxu0 0
        %1178 = vmatpush1.bf16.msra.mxu0 %v1158
        %1179 = vmatprep.subr.bf16.mxu0 0
        %1180 = vmatpush1.bf16.msra.mxu0 %v1159
        %1181 = vmatprep.subr.bf16.mxu0 0
        %1182 = vmatpush1.bf16.msra.mxu0 %v1160
        %1183 = vmatprep.subr.bf16.mxu0 0
        %1184 = vmatpush1.bf16.msra.mxu0 %v1161
        %1185 = vmatprep.subr.bf16.mxu0 0
        %1186 = vmatpush1.bf16.msra.mxu0 %v1162
        %1187 = vmatprep.subr.bf16.mxu0 0
        %1188 = vmatpush1.bf16.msra.mxu0 0
        %1189 = vmatprep.subr.bf16.mxu0 0
        %1190 = vmatpush1.bf16.msra.mxu0 0
        %1191 = vmatprep.subr.bf16.mxu0 0
        %1192 = vmatpush1.bf16.msra.mxu0 0
        %1193 = vmatprep.subr.bf16.mxu0 0
        %1194 = vmatpush1.bf16.msra.mxu0 0
        %1195 = vmatprep.subr.bf16.mxu0 0
        %1196 = vmatpush1.bf16.msra.mxu0 0
        %1197 = vmatprep.subr.bf16.mxu0 0
        %1198 = vmatpush1.bf16.msra.mxu0 0
        %1199 = vmatprep.subr.bf16.mxu0 0
        %1200 = vmatpush1.bf16.msra.mxu0 0
        %1201 = vmatprep.subr.bf16.mxu0 0
        %1202 = vmatpush1.bf16.msra.mxu0 0
        %1203 = vmatprep.mubr.bf16.mxu0 0
        %1204 = vmatmul.mubr.bf16.gmra.mrb[0].mxu0 %v1100
        %v1205 = vpop.f32.mrb[0].mxu0
        %v1206 = vadd.f32 %v1122, %v1205
        %v1207 = vpop.f32.mrb[0].mxu0
        %v1208 = vpop.f32.mrb[0].mxu0
        %v1209 = vadd.f32 %v1122, %v1208
        %v1210 = vpop.f32.mrb[0].mxu0
        %1211 = vdwg.mxu0
        %v1212 = vmax.f32 %v1206, 0.0
        %v1213 = vmax.f32 %v1209, 0.0
        %v1214 = vpack.c.bf16 %v1213, %v1212
        %s1215 = scalar_lea.vmem [#allocation2], 192
        %v1216 = vld [vmem:[%s1215] sm:$0xf]
        %v1217 = vld [vmem:[%s1215 + $0x4] sm:$0xf]
        %v1218 = vld [vmem:[%s1215 + $0x8] sm:$0xf]
        %v1219 = vld [vmem:[%s1215 + $0xc] sm:$0xf]
        %v1220 = vld [vmem:[%s1215 + $0x10] sm:$0xf]
        %v1221 = vld [vmem:[%s1215 + $0x14] sm:$0xf]
        %v1222 = vld [vmem:[%s1215 + $0x18] sm:$0xf]
        %v1223 = vld [vmem:[%s1215 + $0x1c] sm:$0xf]
        %v1224 = vld [vmem:[%s1215 + $0x20] sm:$0xf]
        %v1225 = vld [vmem:[%s1215 + $0x24] sm:$0xf]
        %v1226 = vld [vmem:[%s1215 + $0x28] sm:$0xf]
        %v1227 = vld [vmem:[%s1215 + $0x2c] sm:$0xf]
        %v1228 = vld [vmem:[%s1215 + $0x30] sm:$0xf]
        %v1229 = vld [vmem:[%s1215 + $0x34] sm:$0xf]
        %v1230 = vld [vmem:[%s1215 + $0x38] sm:$0xf]
        %v1231 = vld [vmem:[%s1215 + $0x3c] sm:$0xf]
        %v1232 = vld [vmem:[%s4 + $0x4] sm:$0x1]
        %v1233 = vlaneseq
        %v1234 = vshrl.u32 %v1233, 7
        %v1235 = vsub.s32 0, %v1234
        %v1236 = vrot.slane %v1232, %v1235
        %v1253 = vunpack.c.l.b16 %v1216
        %v1254 = vunpack.c.l.b16 %v1217
        %v1255 = vunpack.c.l.b16 %v1218
        %v1256 = vunpack.c.l.b16 %v1219
        %v1257 = vunpack.c.l.b16 %v1220
        %v1258 = vunpack.c.l.b16 %v1221
        %v1259 = vunpack.c.l.b16 %v1222
        %v1260 = vunpack.c.l.b16 %v1223
        %v1261 = vunpack.c.l.b16 %v1224
        %v1262 = vunpack.c.l.b16 %v1225
        %v1263 = vunpack.c.l.b16 %v1226
        %v1264 = vunpack.c.l.b16 %v1227
        %v1265 = vunpack.c.l.b16 %v1228
        %v1266 = vunpack.c.l.b16 %v1229
        %v1267 = vunpack.c.l.b16 %v1230
        %v1268 = vunpack.c.l.b16 %v1231
        %v1269 = vpack.c.b16 %v1254, %v1253
        %v1270 = vpack.c.b16 %v1256, %v1255
        %v1271 = vpack.c.b16 %v1258, %v1257
        %v1272 = vpack.c.b16 %v1260, %v1259
        %v1273 = vpack.c.b16 %v1262, %v1261
        %v1274 = vpack.c.b16 %v1264, %v1263
        %v1275 = vpack.c.b16 %v1266, %v1265
        %v1276 = vpack.c.b16 %v1268, %v1267
        %1285 = vmatprep.subr.bf16.mxu0 0
        %1286 = vmatpush1.bf16.msra.mxu0 %v1269
        %1287 = vmatprep.subr.bf16.mxu0 0
        %1288 = vmatpush1.bf16.msra.mxu0 %v1270
        %1289 = vmatprep.subr.bf16.mxu0 0
        %1290 = vmatpush1.bf16.msra.mxu0 %v1271
        %1291 = vmatprep.subr.bf16.mxu0 0
        %1292 = vmatpush1.bf16.msra.mxu0 %v1272
        %1293 = vmatprep.subr.bf16.mxu0 0
        %1294 = vmatpush1.bf16.msra.mxu0 %v1273
        %1295 = vmatprep.subr.bf16.mxu0 0
        %1296 = vmatpush1.bf16.msra.mxu0 %v1274
        %1297 = vmatprep.subr.bf16.mxu0 0
        %1298 = vmatpush1.bf16.msra.mxu0 %v1275
        %1299 = vmatprep.subr.bf16.mxu0 0
        %1300 = vmatpush1.bf16.msra.mxu0 %v1276
        %1301 = vmatprep.subr.bf16.mxu0 0
        %1302 = vmatpush1.bf16.msra.mxu0 0
        %1303 = vmatprep.subr.bf16.mxu0 0
        %1304 = vmatpush1.bf16.msra.mxu0 0
        %1305 = vmatprep.subr.bf16.mxu0 0
        %1306 = vmatpush1.bf16.msra.mxu0 0
        %1307 = vmatprep.subr.bf16.mxu0 0
        %1308 = vmatpush1.bf16.msra.mxu0 0
        %1309 = vmatprep.subr.bf16.mxu0 0
        %1310 = vmatpush1.bf16.msra.mxu0 0
        %1311 = vmatprep.subr.bf16.mxu0 0
        %1312 = vmatpush1.bf16.msra.mxu0 0
        %1313 = vmatprep.subr.bf16.mxu0 0
        %1314 = vmatpush1.bf16.msra.mxu0 0
        %1315 = vmatprep.subr.bf16.mxu0 0
        %1316 = vmatpush1.bf16.msra.mxu0 0
        %1317 = vmatprep.mubr.bf16.mxu0 0
        %1318 = vmatmul.mubr.bf16.gmra.mrb[0].mxu0 %v1214
        %v1319 = vpop.f32.mrb[0].mxu0
        %v1320 = vadd.f32 %v1236, %v1319
        %v1321 = vpop.f32.mrb[0].mxu0
        %v1322 = vpop.f32.mrb[0].mxu0
        %v1323 = vadd.f32 %v1236, %v1322
        %v1324 = vpop.f32.mrb[0].mxu0
        %1325 = vdwg.mxu0
        %v1326 = vmax.f32 %v1320, 0.0
        %v1327 = vmax.f32 %v1323, 0.0
        %v1328 = vpack.c.bf16 %v1327, %v1326
        %s1329 = scalar_lea.vmem [#allocation2], 256
        %v1330 = vld [vmem:[%s1329] sm:$0xf]
        %v1331 = vld [vmem:[%s1329 + $0x4] sm:$0xf]
        %v1332 = vld [vmem:[%s1329 + $0x8] sm:$0xf]
        %v1333 = vld [vmem:[%s1329 + $0xc] sm:$0xf]
        %v1334 = vld [vmem:[%s1329 + $0x10] sm:$0xf]
        %v1335 = vld [vmem:[%s1329 + $0x14] sm:$0xf]
        %v1336 = vld [vmem:[%s1329 + $0x18] sm:$0xf]
        %v1337 = vld [vmem:[%s1329 + $0x1c] sm:$0xf]
        %v1338 = vld [vmem:[%s1329 + $0x20] sm:$0xf]
        %v1339 = vld [vmem:[%s1329 + $0x24] sm:$0xf]
        %v1340 = vld [vmem:[%s1329 + $0x28] sm:$0xf]
        %v1341 = vld [vmem:[%s1329 + $0x2c] sm:$0xf]
        %v1342 = vld [vmem:[%s1329 + $0x30] sm:$0xf]
        %v1343 = vld [vmem:[%s1329 + $0x34] sm:$0xf]
        %v1344 = vld [vmem:[%s1329 + $0x38] sm:$0xf]
        %v1345 = vld [vmem:[%s1329 + $0x3c] sm:$0xf]
        %v1346 = vld [vmem:[%s4 + $0x5] sm:$0x1]
        %v1347 = vlaneseq
        %v1348 = vshrl.u32 %v1347, 7
        %v1349 = vsub.s32 0, %v1348
        %v1350 = vrot.slane %v1346, %v1349
        %v1367 = vunpack.c.l.b16 %v1330
        %v1368 = vunpack.c.l.b16 %v1331
        %v1369 = vunpack.c.l.b16 %v1332
        %v1370 = vunpack.c.l.b16 %v1333
        %v1371 = vunpack.c.l.b16 %v1334
        %v1372 = vunpack.c.l.b16 %v1335
        %v1373 = vunpack.c.l.b16 %v1336
        %v1374 = vunpack.c.l.b16 %v1337
        %v1375 = vunpack.c.l.b16 %v1338
        %v1376 = vunpack.c.l.b16 %v1339
        %v1377 = vunpack.c.l.b16 %v1340
        %v1378 = vunpack.c.l.b16 %v1341
        %v1379 = vunpack.c.l.b16 %v1342
        %v1380 = vunpack.c.l.b16 %v1343
        %v1381 = vunpack.c.l.b16 %v1344
        %v1382 = vunpack.c.l.b16 %v1345
        %v1383 = vpack.c.b16 %v1368, %v1367
        %v1384 = vpack.c.b16 %v1370, %v1369
        %v1385 = vpack.c.b16 %v1372, %v1371
        %v1386 = vpack.c.b16 %v1374, %v1373
        %v1387 = vpack.c.b16 %v1376, %v1375
        %v1388 = vpack.c.b16 %v1378, %v1377
        %v1389 = vpack.c.b16 %v1380, %v1379
        %v1390 = vpack.c.b16 %v1382, %v1381
        %1399 = vmatprep.subr.bf16.mxu0 0
        %1400 = vmatpush1.bf16.msra.mxu0 %v1383
        %1401 = vmatprep.subr.bf16.mxu0 0
        %1402 = vmatpush1.bf16.msra.mxu0 %v1384
        %1403 = vmatprep.subr.bf16.mxu0 0
        %1404 = vmatpush1.bf16.msra.mxu0 %v1385
        %1405 = vmatprep.subr.bf16.mxu0 0
        %1406 = vmatpush1.bf16.msra.mxu0 %v1386
        %1407 = vmatprep.subr.bf16.mxu0 0
        %1408 = vmatpush1.bf16.msra.mxu0 %v1387
        %1409 = vmatprep.subr.bf16.mxu0 0
        %1410 = vmatpush1.bf16.msra.mxu0 %v1388
        %1411 = vmatprep.subr.bf16.mxu0 0
        %1412 = vmatpush1.bf16.msra.mxu0 %v1389
        %1413 = vmatprep.subr.bf16.mxu0 0
        %1414 = vmatpush1.bf16.msra.mxu0 %v1390
        %1415 = vmatprep.subr.bf16.mxu0 0
        %1416 = vmatpush1.bf16.msra.mxu0 0
        %1417 = vmatprep.subr.bf16.mxu0 0
        %1418 = vmatpush1.bf16.msra.mxu0 0
        %1419 = vmatprep.subr.bf16.mxu0 0
        %1420 = vmatpush1.bf16.msra.mxu0 0
        %1421 = vmatprep.subr.bf16.mxu0 0
        %1422 = vmatpush1.bf16.msra.mxu0 0
        %1423 = vmatprep.subr.bf16.mxu0 0
        %1424 = vmatpush1.bf16.msra.mxu0 0
        %1425 = vmatprep.subr.bf16.mxu0 0
        %1426 = vmatpush1.bf16.msra.mxu0 0
        %1427 = vmatprep.subr.bf16.mxu0 0
        %1428 = vmatpush1.bf16.msra.mxu0 0
        %1429 = vmatprep.subr.bf16.mxu0 0
        %1430 = vmatpush1.bf16.msra.mxu0 0
        %1431 = vmatprep.mubr.bf16.mxu0 0
        %1432 = vmatmul.mubr.bf16.gmra.mrb[0].mxu0 %v1328
        %v1433 = vpop.f32.mrb[0].mxu0
        %v1434 = vadd.f32 %v1350, %v1433
        %v1435 = vpop.f32.mrb[0].mxu0
        %v1436 = vpop.f32.mrb[0].mxu0
        %v1437 = vadd.f32 %v1350, %v1436
        %v1438 = vpop.f32.mrb[0].mxu0
        %1439 = vdwg.mxu0
        %v1440 = vmax.f32 %v1434, 0.0
        %v1441 = vmax.f32 %v1437, 0.0
        %v1442 = vpack.c.bf16 %v1441, %v1440
        %v1443 = vld [vmem:[%s3] sm:$0xff]
        %v1444 = vld [vmem:[%s3 + $0x8] sm:$0xff]
        %v1445 = vld [vmem:[%s3 + $0x10] sm:$0xff]
        %v1446 = vld [vmem:[%s3 + $0x18] sm:$0xf]
        %v1447 = vld [vmem:[%s3 + $0x1c] sm:$0xff]
        %v1448 = vld [vmem:[%s3 + $0x24] sm:$0xff]
        %v1449 = vld [vmem:[%s3 + $0x2c] sm:$0xff]
        %v1450 = vld [vmem:[%s3 + $0x34] sm:$0xf]
        %v1451 = vld [vmem:[%s3 + $0x38] sm:$0xff]
        %v1452 = vld [vmem:[%s3 + $0x40] sm:$0xff]
        %v1453 = vld [vmem:[%s3 + $0x48] sm:$0xff]
        %v1454 = vld [vmem:[%s3 + $0x50] sm:$0xf]
        %v1455 = vld [vmem:[%s3 + $0x54] sm:$0xff]
        %v1456 = vld [vmem:[%s3 + $0x5c] sm:$0xff]
        %v1457 = vld [vmem:[%s3 + $0x64] sm:$0xff]
        %v1458 = vld [vmem:[%s3 + $0x6c] sm:$0xf]
        %v1459 = vld [vmem:[%s3 + $0x70] sm:$0xff]
        %v1460 = vld [vmem:[%s3 + $0x78] sm:$0xff]
        %v1461 = vld [vmem:[%s3 + $0x80] sm:$0xff]
        %v1462 = vld [vmem:[%s3 + $0x88] sm:$0xf]
        %v1463 = vld [vmem:[%s3 + $0x8c] sm:$0xff]
        %v1464 = vld [vmem:[%s3 + $0x94] sm:$0xff]
        %v1465 = vld [vmem:[%s3 + $0x9c] sm:$0xff]
        %v1466 = vld [vmem:[%s3 + $0xa4] sm:$0xf]
        %v1467 = vld [vmem:[%s3 + $0xa8] sm:$0xff]
        %v1468 = vld [vmem:[%s3 + $0xb0] sm:$0xff]
        %v1469 = vld [vmem:[%s3 + $0xb8] sm:$0xff]
        %v1470 = vld [vmem:[%s3 + $0xc0] sm:$0xf]
        %v1471 = vld [vmem:[%s3 + $0xc4] sm:$0xff]
        %v1472 = vld [vmem:[%s3 + $0xcc] sm:$0xff]
        %v1473 = vld [vmem:[%s3 + $0xd4] sm:$0xff]
        %v1474 = vld [vmem:[%s3 + $0xdc] sm:$0xf]
        %v1475 = vld [vmem:[%s3 + $0xe0] sm:$0xff]
        %v1476 = vld [vmem:[%s3 + $0xe8] sm:$0xff]
        %v1477 = vld [vmem:[%s3 + $0xf0] sm:$0xff]
        %v1478 = vld [vmem:[%s3 + $0xf8] sm:$0xf]
        %v1479 = vld [vmem:[%s3 + $0xfc] sm:$0xff]
        %v1480 = vld [vmem:[%s3 + $0x104] sm:$0xff]
        %v1481 = vld [vmem:[%s3 + $0x10c] sm:$0xff]
        %v1482 = vld [vmem:[%s3 + $0x114] sm:$0xf]
        %v1483 = vld [vmem:[%s3 + $0x118] sm:$0xff]
        %v1484 = vld [vmem:[%s3 + $0x120] sm:$0xff]
        %v1485 = vld [vmem:[%s3 + $0x128] sm:$0xff]
        %v1486 = vld [vmem:[%s3 + $0x130] sm:$0xf]
        %v1487 = vld [vmem:[%s3 + $0x134] sm:$0xff]
        %v1488 = vld [vmem:[%s3 + $0x13c] sm:$0xff]
        %v1489 = vld [vmem:[%s3 + $0x144] sm:$0xff]
        %v1490 = vld [vmem:[%s3 + $0x14c] sm:$0xf]
        %v1491 = vld [vmem:[%s3 + $0x150] sm:$0xff]
        %v1492 = vld [vmem:[%s3 + $0x158] sm:$0xff]
        %v1493 = vld [vmem:[%s3 + $0x160] sm:$0xff]
        %v1494 = vld [vmem:[%s3 + $0x168] sm:$0xf]
        %v1495 = vld [vmem:[%s3 + $0x16c] sm:$0xff]
        %v1496 = vld [vmem:[%s3 + $0x174] sm:$0xff]
        %v1497 = vld [vmem:[%s3 + $0x17c] sm:$0xff]
        %v1498 = vld [vmem:[%s3 + $0x184] sm:$0xf]
        %v1499 = vld [vmem:[%s3 + $0x188] sm:$0xff]
        %v1500 = vld [vmem:[%s3 + $0x190] sm:$0xff]
        %v1501 = vld [vmem:[%s3 + $0x198] sm:$0xff]
        %v1502 = vld [vmem:[%s3 + $0x1a0] sm:$0xf]
        %v1503 = vld [vmem:[%s3 + $0x1a4] sm:$0xff]
        %v1504 = vld [vmem:[%s3 + $0x1ac] sm:$0xff]
        %v1505 = vld [vmem:[%s3 + $0x1b4] sm:$0xff]
        %v1506 = vld [vmem:[%s3 + $0x1bc] sm:$0xf]
        %v1507 = vld [vmem:[#allocation5] sm:$0x7f]
        %v1509 = vlaneseq
        %v1510 = vshrl.u32 %v1509, 7
        %v1511 = vsub.s32 0, %v1510
        %v1512 = vrot.slane %v1507, %v1511
        %v1513 = vlaneseq
        %v1514 = vshrl.u32 %v1513, 7
        %v1515 = vsub.s32 1, %v1514
        %v1516 = vrot.slane %v1507, %v1515
        %v1517 = vlaneseq
        %v1518 = vshrl.u32 %v1517, 7
        %v1519 = vsub.s32 2, %v1518
        %v1520 = vrot.slane %v1507, %v1519
        %v1521 = vlaneseq
        %v1522 = vshrl.u32 %v1521, 7
        %v1523 = vsub.s32 3, %v1522
        %v1524 = vrot.slane %v1507, %v1523
        %v1525 = vlaneseq
        %v1526 = vshrl.u32 %v1525, 7
        %v1527 = vsub.s32 4, %v1526
        %v1528 = vrot.slane %v1507, %v1527
        %v1529 = vlaneseq
        %v1530 = vshrl.u32 %v1529, 7
        %v1531 = vsub.s32 5, %v1530
        %v1532 = vrot.slane %v1507, %v1531
        %v1533 = vlaneseq
        %v1534 = vshrl.u32 %v1533, 7
        %v1535 = vsub.s32 6, %v1534
        %v1536 = vrot.slane %v1507, %v1535
        %v1608 = vunpack.c.l.b16 %v1443
        %v1609 = vunpack.c.h.b16 %v1443
        %v1610 = vunpack.c.l.b16 %v1444
        %v1611 = vunpack.c.h.b16 %v1444
        %v1612 = vunpack.c.l.b16 %v1445
        %v1613 = vunpack.c.h.b16 %v1445
        %v1614 = vunpack.c.l.b16 %v1446
        %v1615 = vunpack.c.l.b16 %v1447
        %v1616 = vunpack.c.h.b16 %v1447
        %v1617 = vunpack.c.l.b16 %v1448
        %v1618 = vunpack.c.h.b16 %v1448
        %v1619 = vunpack.c.l.b16 %v1449
        %v1620 = vunpack.c.h.b16 %v1449
        %v1621 = vunpack.c.l.b16 %v1450
        %v1622 = vunpack.c.l.b16 %v1451
        %v1623 = vunpack.c.h.b16 %v1451
        %v1624 = vunpack.c.l.b16 %v1452
        %v1625 = vunpack.c.h.b16 %v1452
        %v1626 = vunpack.c.l.b16 %v1453
        %v1627 = vunpack.c.h.b16 %v1453
        %v1628 = vunpack.c.l.b16 %v1454
        %v1629 = vunpack.c.l.b16 %v1455
        %v1630 = vunpack.c.h.b16 %v1455
        %v1631 = vunpack.c.l.b16 %v1456
        %v1632 = vunpack.c.h.b16 %v1456
        %v1633 = vunpack.c.l.b16 %v1457
        %v1634 = vunpack.c.h.b16 %v1457
        %v1635 = vunpack.c.l.b16 %v1458
        %v1636 = vunpack.c.l.b16 %v1459
        %v1637 = vunpack.c.h.b16 %v1459
        %v1638 = vunpack.c.l.b16 %v1460
        %v1639 = vunpack.c.h.b16 %v1460
        %v1640 = vunpack.c.l.b16 %v1461
        %v1641 = vunpack.c.h.b16 %v1461
        %v1642 = vunpack.c.l.b16 %v1462
        %v1643 = vunpack.c.l.b16 %v1463
        %v1644 = vunpack.c.h.b16 %v1463
        %v1645 = vunpack.c.l.b16 %v1464
        %v1646 = vunpack.c.h.b16 %v1464
        %v1647 = vunpack.c.l.b16 %v1465
        %v1648 = vunpack.c.h.b16 %v1465
        %v1649 = vunpack.c.l.b16 %v1466
        %v1650 = vunpack.c.l.b16 %v1467
        %v1651 = vunpack.c.h.b16 %v1467
        %v1652 = vunpack.c.l.b16 %v1468
        %v1653 = vunpack.c.h.b16 %v1468
        %v1654 = vunpack.c.l.b16 %v1469
        %v1655 = vunpack.c.h.b16 %v1469
        %v1656 = vunpack.c.l.b16 %v1470
        %v1657 = vunpack.c.l.b16 %v1471
        %v1658 = vunpack.c.h.b16 %v1471
        %v1659 = vunpack.c.l.b16 %v1472
        %v1660 = vunpack.c.h.b16 %v1472
        %v1661 = vunpack.c.l.b16 %v1473
        %v1662 = vunpack.c.h.b16 %v1473
        %v1663 = vunpack.c.l.b16 %v1474
        %v1664 = vunpack.c.l.b16 %v1475
        %v1665 = vunpack.c.h.b16 %v1475
        %v1666 = vunpack.c.l.b16 %v1476
        %v1667 = vunpack.c.h.b16 %v1476
        %v1668 = vunpack.c.l.b16 %v1477
        %v1669 = vunpack.c.h.b16 %v1477
        %v1670 = vunpack.c.l.b16 %v1478
        %v1671 = vunpack.c.l.b16 %v1479
        %v1672 = vunpack.c.h.b16 %v1479
        %v1673 = vunpack.c.l.b16 %v1480
        %v1674 = vunpack.c.h.b16 %v1480
        %v1675 = vunpack.c.l.b16 %v1481
        %v1676 = vunpack.c.h.b16 %v1481
        %v1677 = vunpack.c.l.b16 %v1482
        %v1678 = vunpack.c.l.b16 %v1483
        %v1679 = vunpack.c.h.b16 %v1483
        %v1680 = vunpack.c.l.b16 %v1484
        %v1681 = vunpack.c.h.b16 %v1484
        %v1682 = vunpack.c.l.b16 %v1485
        %v1683 = vunpack.c.h.b16 %v1485
        %v1684 = vunpack.c.l.b16 %v1486
        %v1685 = vunpack.c.l.b16 %v1487
        %v1686 = vunpack.c.h.b16 %v1487
        %v1687 = vunpack.c.l.b16 %v1488
        %v1688 = vunpack.c.h.b16 %v1488
        %v1689 = vunpack.c.l.b16 %v1489
        %v1690 = vunpack.c.h.b16 %v1489
        %v1691 = vunpack.c.l.b16 %v1490
        %v1692 = vunpack.c.l.b16 %v1491
        %v1693 = vunpack.c.h.b16 %v1491
        %v1694 = vunpack.c.l.b16 %v1492
        %v1695 = vunpack.c.h.b16 %v1492
        %v1696 = vunpack.c.l.b16 %v1493
        %v1697 = vunpack.c.h.b16 %v1493
        %v1698 = vunpack.c.l.b16 %v1494
        %v1699 = vunpack.c.l.b16 %v1495
        %v1700 = vunpack.c.h.b16 %v1495
        %v1701 = vunpack.c.l.b16 %v1496
        %v1702 = vunpack.c.h.b16 %v1496
        %v1703 = vunpack.c.l.b16 %v1497
        %v1704 = vunpack.c.h.b16 %v1497
        %v1705 = vunpack.c.l.b16 %v1498
        %v1706 = vunpack.c.l.b16 %v1499
        %v1707 = vunpack.c.h.b16 %v1499
        %v1708 = vunpack.c.l.b16 %v1500
        %v1709 = vunpack.c.h.b16 %v1500
        %v1710 = vunpack.c.l.b16 %v1501
        %v1711 = vunpack.c.h.b16 %v1501
        %v1712 = vunpack.c.l.b16 %v1502
        %v1713 = vunpack.c.l.b16 %v1503
        %v1714 = vunpack.c.h.b16 %v1503
        %v1715 = vunpack.c.l.b16 %v1504
        %v1716 = vunpack.c.h.b16 %v1504
        %v1717 = vunpack.c.l.b16 %v1505
        %v1718 = vunpack.c.h.b16 %v1505
        %v1719 = vunpack.c.l.b16 %v1506
        %v1720 = vpack.c.b16 %v1615, %v1608
        %v1721 = vpack.c.b16 %v1616, %v1609
        %v1722 = vpack.c.b16 %v1617, %v1610
        %v1723 = vpack.c.b16 %v1618, %v1611
        %v1724 = vpack.c.b16 %v1619, %v1612
        %v1725 = vpack.c.b16 %v1620, %v1613
        %v1726 = vpack.c.b16 %v1621, %v1614
        %v1727 = vpack.c.b16 %v1629, %v1622
        %v1728 = vpack.c.b16 %v1630, %v1623
        %v1729 = vpack.c.b16 %v1631, %v1624
        %v1730 = vpack.c.b16 %v1632, %v1625
        %v1731 = vpack.c.b16 %v1633, %v1626
        %v1732 = vpack.c.b16 %v1634, %v1627
        %v1733 = vpack.c.b16 %v1635, %v1628
        %v1734 = vpack.c.b16 %v1643, %v1636
        %v1735 = vpack.c.b16 %v1644, %v1637
        %v1736 = vpack.c.b16 %v1645, %v1638
        %v1737 = vpack.c.b16 %v1646, %v1639
        %v1738 = vpack.c.b16 %v1647, %v1640
        %v1739 = vpack.c.b16 %v1648, %v1641
        %v1740 = vpack.c.b16 %v1649, %v1642
        %v1741 = vpack.c.b16 %v1657, %v1650
        %v1742 = vpack.c.b16 %v1658, %v1651
        %v1743 = vpack.c.b16 %v1659, %v1652
        %v1744 = vpack.c.b16 %v1660, %v1653
        %v1745 = vpack.c.b16 %v1661, %v1654
        %v1746 = vpack.c.b16 %v1662, %v1655
        %v1747 = vpack.c.b16 %v1663, %v1656
        %v1748 = vpack.c.b16 %v1671, %v1664
        %v1749 = vpack.c.b16 %v1672, %v1665
        %v1750 = vpack.c.b16 %v1673, %v1666
        %v1751 = vpack.c.b16 %v1674, %v1667
        %v1752 = vpack.c.b16 %v1675, %v1668
        %v1753 = vpack.c.b16 %v1676, %v1669
        %v1754 = vpack.c.b16 %v1677, %v1670
        %v1755 = vpack.c.b16 %v1685, %v1678
        %v1756 = vpack.c.b16 %v1686, %v1679
        %v1757 = vpack.c.b16 %v1687, %v1680
        %v1758 = vpack.c.b16 %v1688, %v1681
        %v1759 = vpack.c.b16 %v1689, %v1682
        %v1760 = vpack.c.b16 %v1690, %v1683
        %v1761 = vpack.c.b16 %v1691, %v1684
        %v1762 = vpack.c.b16 %v1699, %v1692
        %v1763 = vpack.c.b16 %v1700, %v1693
        %v1764 = vpack.c.b16 %v1701, %v1694
        %v1765 = vpack.c.b16 %v1702, %v1695
        %v1766 = vpack.c.b16 %v1703, %v1696
        %v1767 = vpack.c.b16 %v1704, %v1697
        %v1768 = vpack.c.b16 %v1705, %v1698
        %v1769 = vpack.c.b16 %v1713, %v1706
        %v1770 = vpack.c.b16 %v1714, %v1707
        %v1771 = vpack.c.b16 %v1715, %v1708
        %v1772 = vpack.c.b16 %v1716, %v1709
        %v1773 = vpack.c.b16 %v1717, %v1710
        %v1774 = vpack.c.b16 %v1718, %v1711
        %v1775 = vpack.c.b16 %v1719, %v1712
        %1832 = vmatprep.subr.bf16.mxu0 %v1721
        %1833 = vmatpush1.bf16.msra.mxu0 %v1720
        %1834 = vmatprep.subr.bf16.mxu0 %v1728
        %1835 = vmatpush1.bf16.msra.mxu0 %v1727
        %1836 = vmatprep.subr.bf16.mxu0 %v1735
        %1837 = vmatpush1.bf16.msra.mxu0 %v1734
        %1838 = vmatprep.subr.bf16.mxu0 %v1742
        %1839 = vmatpush1.bf16.msra.mxu0 %v1741
        %1840 = vmatprep.subr.bf16.mxu0 %v1749
        %1841 = vmatpush1.bf16.msra.mxu0 %v1748
        %1842 = vmatprep.subr.bf16.mxu0 %v1756
        %1843 = vmatpush1.bf16.msra.mxu0 %v1755
        %1844 = vmatprep.subr.bf16.mxu0 %v1763
        %1845 = vmatpush1.bf16.msra.mxu0 %v1762
        %1846 = vmatprep.subr.bf16.mxu0 %v1770
        %1847 = vmatpush1.bf16.msra.mxu0 %v1769
        %1848 = vmatprep.subr.bf16.mxu0 0
        %1849 = vmatpush1.bf16.msra.mxu0 0
        %1850 = vmatprep.subr.bf16.mxu0 0
        %1851 = vmatpush1.bf16.msra.mxu0 0
        %1852 = vmatprep.subr.bf16.mxu0 0
        %1853 = vmatpush1.bf16.msra.mxu0 0
        %1854 = vmatprep.subr.bf16.mxu0 0
        %1855 = vmatpush1.bf16.msra.mxu0 0
        %1856 = vmatprep.subr.bf16.mxu0 0
        %1857 = vmatpush1.bf16.msra.mxu0 0
        %1858 = vmatprep.subr.bf16.mxu0 0
        %1859 = vmatpush1.bf16.msra.mxu0 0
        %1860 = vmatprep.subr.bf16.mxu0 0
        %1861 = vmatpush1.bf16.msra.mxu0 0
        %1862 = vmatprep.subr.bf16.mxu0 0
        %1863 = vmatpush1.bf16.msra.mxu0 0
        %1864 = vmatprep.mubr.bf16.mxu0 0
        %1865 = vmatmul.mubr.bf16.gmra.mrb[0].mxu0 %v1442
        %v1866 = vpop.f32.mrb[0].mxu0
        %v1867 = vadd.f32 %v1512, %v1866
        %v1868 = vpop.f32.mrb[0].mxu0
        %v1869 = vadd.f32 %v1516, %v1868
        %v1870 = vpop.f32.mrb[0].mxu0
        %v1871 = vadd.f32 %v1512, %v1870
        %v1872 = vpop.f32.mrb[0].mxu0
        %v1873 = vadd.f32 %v1516, %v1872
        %1874 = vdwg.mxu0
        %1875 = vmatprep.subr.bf16.mxu0 %v1723
        %1876 = vmatpush1.bf16.msra.mxu0 %v1722
        %1877 = vmatprep.subr.bf16.mxu0 %v1730
        %1878 = vmatpush1.bf16.msra.mxu0 %v1729
        %1879 = vmatprep.subr.bf16.mxu0 %v1737
        %1880 = vmatpush1.bf16.msra.mxu0 %v1736
        %1881 = vmatprep.subr.bf16.mxu0 %v1744
        %1882 = vmatpush1.bf16.msra.mxu0 %v1743
        %1883 = vmatprep.subr.bf16.mxu0 %v1751
        %1884 = vmatpush1.bf16.msra.mxu0 %v1750
        %1885 = vmatprep.subr.bf16.mxu0 %v1758
        %1886 = vmatpush1.bf16.msra.mxu0 %v1757
        %1887 = vmatprep.subr.bf16.mxu0 %v1765
        %1888 = vmatpush1.bf16.msra.mxu0 %v1764
        %1889 = vmatprep.subr.bf16.mxu0 %v1772
        %1890 = vmatpush1.bf16.msra.mxu0 %v1771
        %1891 = vmatprep.subr.bf16.mxu0 0
        %1892 = vmatpush1.bf16.msra.mxu0 0
        %1893 = vmatprep.subr.bf16.mxu0 0
        %1894 = vmatpush1.bf16.msra.mxu0 0
        %1895 = vmatprep.subr.bf16.mxu0 0
        %1896 = vmatpush1.bf16.msra.mxu0 0
        %1897 = vmatprep.subr.bf16.mxu0 0
        %1898 = vmatpush1.bf16.msra.mxu0 0
        %1899 = vmatprep.subr.bf16.mxu0 0
        %1900 = vmatpush1.bf16.msra.mxu0 0
        %1901 = vmatprep.subr.bf16.mxu0 0
        %1902 = vmatpush1.bf16.msra.mxu0 0
        %1903 = vmatprep.subr.bf16.mxu0 0
        %1904 = vmatpush1.bf16.msra.mxu0 0
        %1905 = vmatprep.subr.bf16.mxu0 0
        %1906 = vmatpush1.bf16.msra.mxu0 0
        %1907 = vmatprep.mubr.bf16.mxu0 0
        %1908 = vmatmul.mubr.bf16.gmra.mrb[0].mxu0 %v1442
        %v1909 = vpop.f32.mrb[0].mxu0
        %v1910 = vadd.f32 %v1520, %v1909
        %v1911 = vpop.f32.mrb[0].mxu0
        %v1912 = vadd.f32 %v1524, %v1911
        %v1913 = vpop.f32.mrb[0].mxu0
        %v1914 = vadd.f32 %v1520, %v1913
        %v1915 = vpop.f32.mrb[0].mxu0
        %v1916 = vadd.f32 %v1524, %v1915
        %1917 = vdwg.mxu0
        %1918 = vmatprep.subr.bf16.mxu0 %v1725
        %1919 = vmatpush1.bf16.msra.mxu0 %v1724
        %1920 = vmatprep.subr.bf16.mxu0 %v1732
        %1921 = vmatpush1.bf16.msra.mxu0 %v1731
        %1922 = vmatprep.subr.bf16.mxu0 %v1739
        %1923 = vmatpush1.bf16.msra.mxu0 %v1738
        %1924 = vmatprep.subr.bf16.mxu0 %v1746
        %1925 = vmatpush1.bf16.msra.mxu0 %v1745
        %1926 = vmatprep.subr.bf16.mxu0 %v1753
        %1927 = vmatpush1.bf16.msra.mxu0 %v1752
        %1928 = vmatprep.subr.bf16.mxu0 %v1760
        %1929 = vmatpush1.bf16.msra.mxu0 %v1759
        %1930 = vmatprep.subr.bf16.mxu0 %v1767
        %1931 = vmatpush1.bf16.msra.mxu0 %v1766
        %1932 = vmatprep.subr.bf16.mxu0 %v1774
        %1933 = vmatpush1.bf16.msra.mxu0 %v1773
        %1934 = vmatprep.subr.bf16.mxu0 0
        %1935 = vmatpush1.bf16.msra.mxu0 0
        %1936 = vmatprep.subr.bf16.mxu0 0
        %1937 = vmatpush1.bf16.msra.mxu0 0
        %1938 = vmatprep.subr.bf16.mxu0 0
        %1939 = vmatpush1.bf16.msra.mxu0 0
        %1940 = vmatprep.subr.bf16.mxu0 0
        %1941 = vmatpush1.bf16.msra.mxu0 0
        %1942 = vmatprep.subr.bf16.mxu0 0
        %1943 = vmatpush1.bf16.msra.mxu0 0
        %1944 = vmatprep.subr.bf16.mxu0 0
        %1945 = vmatpush1.bf16.msra.mxu0 0
        %1946 = vmatprep.subr.bf16.mxu0 0
        %1947 = vmatpush1.bf16.msra.mxu0 0
        %1948 = vmatprep.subr.bf16.mxu0 0
        %1949 = vmatpush1.bf16.msra.mxu0 0
        %1950 = vmatprep.mubr.bf16.mxu0 0
        %1951 = vmatmul.mubr.bf16.gmra.mrb[0].mxu0 %v1442
        %v1952 = vpop.f32.mrb[0].mxu0
        %v1953 = vadd.f32 %v1528, %v1952
        %v1954 = vpop.f32.mrb[0].mxu0
        %v1955 = vadd.f32 %v1532, %v1954
        %v1956 = vpop.f32.mrb[0].mxu0
        %v1957 = vadd.f32 %v1528, %v1956
        %v1958 = vpop.f32.mrb[0].mxu0
        %v1959 = vadd.f32 %v1532, %v1958
        %1960 = vdwg.mxu0
        %1961 = vmatprep.subr.bf16.mxu0 0
        %1962 = vmatpush1.bf16.msra.mxu0 %v1726
        %1963 = vmatprep.subr.bf16.mxu0 0
        %1964 = vmatpush1.bf16.msra.mxu0 %v1733
        %1965 = vmatprep.subr.bf16.mxu0 0
        %1966 = vmatpush1.bf16.msra.mxu0 %v1740
        %1967 = vmatprep.subr.bf16.mxu0 0
        %1968 = vmatpush1.bf16.msra.mxu0 %v1747
        %1969 = vmatprep.subr.bf16.mxu0 0
        %1970 = vmatpush1.bf16.msra.mxu0 %v1754
        %1971 = vmatprep.subr.bf16.mxu0 0
        %1972 = vmatpush1.bf16.msra.mxu0 %v1761
        %1973 = vmatprep.subr.bf16.mxu0 0
        %1974 = vmatpush1.bf16.msra.mxu0 %v1768
        %1975 = vmatprep.subr.bf16.mxu0 0
        %1976 = vmatpush1.bf16.msra.mxu0 %v1775
        %1977 = vmatprep.subr.bf16.mxu0 0
        %1978 = vmatpush1.bf16.msra.mxu0 0
        %1979 = vmatprep.subr.bf16.mxu0 0
        %1980 = vmatpush1.bf16.msra.mxu0 0
        %1981 = vmatprep.subr.bf16.mxu0 0
        %1982 = vmatpush1.bf16.msra.mxu0 0
        %1983 = vmatprep.subr.bf16.mxu0 0
        %1984 = vmatpush1.bf16.msra.mxu0 0
        %1985 = vmatprep.subr.bf16.mxu0 0
        %1986 = vmatpush1.bf16.msra.mxu0 0
        %1987 = vmatprep.subr.bf16.mxu0 0
        %1988 = vmatpush1.bf16.msra.mxu0 0
        %1989 = vmatprep.subr.bf16.mxu0 0
        %1990 = vmatpush1.bf16.msra.mxu0 0
        %1991 = vmatprep.subr.bf16.mxu0 0
        %1992 = vmatpush1.bf16.msra.mxu0 0
        %1993 = vmatprep.mubr.bf16.mxu0 0
        %1994 = vmatmul.mubr.bf16.gmra.mrb[0].mxu0 %v1442
        %v1995 = vpop.f32.mrb[0].mxu0
        %v1996 = vadd.f32 %v1536, %v1995
        %v1997 = vpop.f32.mrb[0].mxu0
        %v1998 = vpop.f32.mrb[0].mxu0
        %v1999 = vadd.f32 %v1536, %v1998
        %v2000 = vpop.f32.mrb[0].mxu0
        %2001 = vdwg.mxu0
        %v2002 = vtanh.pop %v1867
        %v2003 = vtanh.pop %v1869
        %v2004 = vtanh.pop %v1910
        %v2005 = vtanh.pop %v1912
        %v2006 = vtanh.pop %v1953
        %v2007 = vtanh.pop %v1955
        %v2008 = vtanh.pop %v1996
        %v2009 = vtanh.pop %v1871
        %v2010 = vtanh.pop %v1873
        %v2011 = vtanh.pop %v1914
        %v2012 = vtanh.pop %v1916
        %v2013 = vtanh.pop %v1957
        %v2014 = vtanh.pop %v1959
        %v2015 = vtanh.pop %v1999
        %2016 = vst [vmem:[%s275] sm:$0xff] %v2002
        %2017 = vst [vmem:[%s275 + $0x8] sm:$0xff] %v2003
        %2018 = vst [vmem:[%s275 + $0x10] sm:$0xff] %v2004
        %2019 = vst [vmem:[%s275 + $0x18] sm:$0xff] %v2005
        %2020 = vst [vmem:[%s275 + $0x20] sm:$0xff] %v2006
        %2021 = vst [vmem:[%s275 + $0x28] sm:$0xff] %v2007
        %2022 = vst.msk [vmem:[%s275 + $0x30] sm:$0xff] %vm703, %v2008
        %2023 = vst [vmem:[%s275 + $0x38] sm:$0xff] %v2009
        %2024 = vst [vmem:[%s275 + $0x40] sm:$0xff] %v2010
        %2025 = vst [vmem:[%s275 + $0x48] sm:$0xff] %v2011
        %2026 = vst [vmem:[%s275 + $0x50] sm:$0xff] %v2012
        %2027 = vst [vmem:[%s275 + $0x58] sm:$0xff] %v2013
        %2028 = vst [vmem:[%s275 + $0x60] sm:$0xff] %v2014
        %2029 = vst.msk [vmem:[%s275 + $0x68] sm:$0xff] %vm703, %v2015
        %s2030 = sand.u32 %s161, 1
        %s2031 = scalar_lea.sflag [#allocation4], %s2030
        %s2032 = sand.u32 %s161, 1
        %s2033 = smul.addr %s2032, 112
        %s2034 = scalar_lea.vmem [#allocation7], %s2033
        // Predicated region
        $region53: #{tpu_custom_call.1} parent=43 // pred_check
          %p2035 = pneg %p171
        $region54: #{tpu_custom_call.1} parent=43 // pred_check_branch
          %2037 = sbr.rel (%p2035) target = $region56
        $region55: #{tpu_custom_call.1} parent=43 // pred_region
          %s2038 = smul.u32 2, %s22
          %s2040 = ssub.s32 1792, 1792
          %2041 = vsyncadd %s2031, %s2040
          %s2042 = smul.addr %s2038, 7
          %s2043 = smul.addr %s2042, 128
          %s2044 = scalar_lea.hbm %s6, %s2043
          %s2045 = sshll.u32 %s2034, 4
          %s2046 = int_to_ptr.vmem [resolvable:$true] %s2045
          %2051 = dma.vmem_to_hbm [thread:$0]  %s2046, 1792, %s2044, %s2031, 896, 896, 56
        $region56: #{tpu_custom_call.1} parent=43 // pred_fallthru
          _
      $region44: #{tpu_custom_call.1} parent=5 // pred_fallthru
        _
      %p2052 = scmp.le.s32.totalorder 2, %s17
      // Predicated region
      $region57: #{tpu_custom_call.1} parent=5 // pred_check
        %p2053 = pneg %p2052
      $region58: #{tpu_custom_call.1} parent=5 // pred_check_branch
        %2055 = sbr.rel (%p2053) target = $region60
      $region59: #{tpu_custom_call.1} parent=5 // pred_region
        %s2056 = ssub.s32 %s17, 2
        // Predicated region
        $region61: #{tpu_custom_call.1} parent=59 // pred_check
          %p2057 = pneg %p177
        $region62: #{tpu_custom_call.1} parent=59 // pred_check_branch
          %2059 = sbr.rel (%p2057) target = $region64
        $region63: #{tpu_custom_call.1} parent=59 // pred_region
          %s2060 = sand.u32 %s162, 1
          %s2061 = scalar_lea.sflag [#allocation4], %s2060
          %s2062 = sand.u32 %s162, 1
          %s2063 = smul.addr %s2062, 112
          %s2064 = scalar_lea.vmem [#allocation7], %s2063
          %2065 = dma.done %s2061, 1792
        $region64: #{tpu_custom_call.1} parent=59 // pred_fallthru
          _
      $region60: #{tpu_custom_call.1} parent=5 // pred_fallthru
        _
    $region6: #{tpu_custom_call.1} parent=1 // loop_footer
      %s21 = sadd.s32 1, %s17
    $region7: #{tpu_custom_call.1} parent=1 // loop_footer_branch
      %16 = sbr.rel target = $region3
    $region8: #{tpu_custom_call.1} parent=1 // loop_exit
      _
    %2066 = vsyncpa [#allocation3], 1
    %s2067 = scalar_lea.sflag [#allocation3], 1
    %2068 = vsyncpa %s2067, 1
    %2069 = vsyncpa [#allocation6], 1
    %2070 = vsyncpa [#allocation4], 1
    %s2071 = scalar_lea.sflag [#allocation4], 1
    %2072 = vsyncpa %s2071, 1

</llo_original>
